<compile_context>
chip_gen: v6e
topology: v6e:2x2x1
jax: 0.10.0
libtpu: 0.0.40
codegen_flags: <defaults>
</compile_context>

<pallas_src>
import math
import jax
import jax.numpy as jnp
from jax.experimental import pallas as pl
from jax.experimental.pallas import tpu as pltpu

# ---- small synthetic BERT config -------------------------------------------
B, S, H = 2, 16, 64              # batch, seq, hidden
NUM_HEADS = 4
HEAD_DIM = H // NUM_HEADS
INTERMEDIATE = 128
SCC_N_LAYER = 2                  # successor layers (the ones used in the eval forward)
NUM_HIDDEN_LAYERS = 4            # predecessor layers exist but are unused in eval
LN_EPS = 1e-12


def _layer_norm(x, gamma, beta):
    mean = jnp.mean(x, axis=-1, keepdims=True)
    var = jnp.mean((x - mean) ** 2, axis=-1, keepdims=True)
    return (x - mean) * jax.lax.rsqrt(var + LN_EPS) * gamma + beta


def _gelu(x):
    # TODO(synk): HF BERT default act is exact erf-GELU; tanh approximation used here
    # (matched by the in-script reference).
    c = math.sqrt(2.0 / math.pi)
    return 0.5 * x * (1.0 + jnp.tanh(c * (x + 0.044715 * x * x * x)))


# ---- Pallas kernel: one grid step = (batch element, layer) -------------------
def bert_encoder_kernel(x_ref, mask_ref,
                        wqkv_ref, bqkv_ref, wo_ref, bo_ref, g1_ref, b1_ref,
                        wi_ref, bi_ref, wo2_ref, bo2_ref, g2_ref, b2_ref,
                        out_ref):
    layer = pl.program_id(1)

    # out_ref is the VMEM-resident carry across the (inner, "arbitrary") layer axis.
    @pl.when(layer == 0)
    def _():
        out_ref[...] = x_ref[...]

    x = out_ref[...]                     # (S, H) f32 carry
    mask = mask_ref[...]                 # (1, S) additive key mask

    # ---- attention: fused QKV projection (1/sqrt(Dh) already folded into Wq/bq) ----
    x_bf = x.astype(jnp.bfloat16)
    qkv = jnp.dot(x_bf, wqkv_ref[...], preferred_element_type=jnp.float32) + bqkv_ref[...]
    qkv_bf = qkv.astype(jnp.bfloat16)    # single cast, sliced per head below

    ctx_heads = []
    for h in range(NUM_HEADS):           # static unroll (NUM_HEADS=4)
        q_h = qkv_bf[:, h * HEAD_DIM:(h + 1) * HEAD_DIM]
        k_h = qkv_bf[:, H + h * HEAD_DIM:H + (h + 1) * HEAD_DIM]
        v_h = qkv_bf[:, 2 * H + h * HEAD_DIM:2 * H + (h + 1) * HEAD_DIM]
        sc = jax.lax.dot_general(q_h, k_h, (((1,), (1,)), ((), ())),
                                 preferred_element_type=jnp.float32) + mask   # (S, S)
        sc = sc - jnp.max(sc, axis=-1, keepdims=True)
        e = jnp.exp(sc)
        p = e * pl.reciprocal(jnp.sum(e, axis=-1, keepdims=True), approx=True)
        ctx_heads.append(jnp.dot(p.astype(jnp.bfloat16), v_h,
                                 preferred_element_type=jnp.float32))         # (S, Dh)

    # un-folded output projection: one K=H matmul instead of NUM_HEADS K=HEAD_DIM dots
    ctx = jnp.concatenate(ctx_heads, axis=-1).astype(jnp.bfloat16)            # (S, H)
    attn = jnp.dot(ctx, wo_ref[...], preferred_element_type=jnp.float32) + bo_ref[...]
    h1 = _layer_norm(attn + x, g1_ref[...], b1_ref[...])

    # ---- feed-forward ----
    inter = _gelu(jnp.dot(h1.astype(jnp.bfloat16), wi_ref[...],
                          preferred_element_type=jnp.float32) + bi_ref[...])
    ffn = jnp.dot(inter.astype(jnp.bfloat16), wo2_ref[...],
                  preferred_element_type=jnp.float32) + bo2_ref[...]
    h2 = _layer_norm(ffn + h1, g2_ref[...], b2_ref[...])

    out_ref[...] = h2.astype(out_ref.dtype)


# ---- host-side parameter packing ---------------------------------------------
def stack_scc_params(scc_params):
    """Stack per-layer params along a leading layer axis; fuse QKV; fold the
    1/sqrt(head_dim) scale into Wq/bq; cast matmul weights to bf16."""
    scale = 1.0 / math.sqrt(HEAD_DIM)
    wqkv_l, bqkv_l, wo_l, bo_l, g1_l, b1_l = [], [], [], [], [], []
    wi_l, bi_l, wo2_l, bo2_l, g2_l, b2_l = [], [], [], [], [], []
    for (wq, bq, wk, bk, wv, bv, wo, bo, g1, b1, wi, bi, wo2, bo2, g2, b2) in scc_params:
        wqkv_l.append(jnp.concatenate([wq * scale, wk, wv], axis=1).astype(jnp.bfloat16))
        bqkv_l.append(jnp.concatenate([bq * scale, bk, bv], axis=1).astype(jnp.float32))
        wo_l.append(wo.astype(jnp.bfloat16)); bo_l.append(bo)
        g1_l.append(g1); b1_l.append(b1)
        wi_l.append(wi.astype(jnp.bfloat16)); bi_l.append(bi)
        wo2_l.append(wo2.astype(jnp.bfloat16)); bo2_l.append(bo2)
        g2_l.append(g2); b2_l.append(b2)
    return [jnp.stack(v, axis=0) for v in (wqkv_l, bqkv_l, wo_l, bo_l, g1_l, b1_l,
                                           wi_l, bi_l, wo2_l, bo2_l, g2_l, b2_l)]


def bert_encoder_forward(hidden_states, attention_mask, scc_params):
    """Eval-mode BertEncoder.forward: run the scc_layer stack in ONE pallas_call."""
    # TODO(synk): training-mode Bernoulli layer sampling / gradient checkpointing,
    # cross-attention, past_key_values, output_attentions / output_hidden_states
    # bookkeeping are host-side control flow; only the eval path is implemented.
    num_layers = len(scc_params)
    stacked = stack_scc_params(scc_params)

    # (B, 1, S) HF-style additive key mask — no dense (B*S, B*S) mask needed.
    mask_add = ((1.0 - attention_mask) * -10000.0).astype(jnp.float32).reshape(B, 1, S)

    def per_batch_spec(shp):
        return pl.BlockSpec((None,) + tuple(shp[1:]),
                            lambda b, l: (b,) + (0,) * (len(shp) - 1))

    def per_layer_spec(shp):
        return pl.BlockSpec((None,) + tuple(shp[1:]),
                            lambda b, l: (l,) + (0,) * (len(shp) - 1))

    out = pl.pallas_call(
        bert_encoder_kernel,
        out_shape=jax.ShapeDtypeStruct((B, S, H), hidden_states.dtype),
        grid=(B, num_layers),
        in_specs=[per_batch_spec((B, S, H)), per_batch_spec((B, 1, S))]
                 + [per_layer_spec(w.shape) for w in stacked],
        out_specs=pl.BlockSpec((None, S, H), lambda b, l: (b, 0, 0)),
        compiler_params=pltpu.CompilerParams(
            dimension_semantics=("parallel", "arbitrary")),
    )(hidden_states, mask_add, *stacked)
    return out


# ---- pure-JAX reference (module semantics, f32) -------------------------------
def bert_layer_ref(x, add_mask, params):
    (wq, bq, wk, bk, wv, bv, wo, bo, g1, b1, wi, bi, wo2, bo2, g2, b2) = params
    q = x @ wq + bq
    k = x @ wk + bk
    v = x @ wv + bv

    def split(t):
        return t.reshape(B, S, NUM_HEADS, HEAD_DIM).transpose(0, 2, 1, 3)

    qh, kh, vh = split(q), split(k), split(v)
    sc = jnp.einsum('bhqd,bhkd->bhqk', qh, kh) / math.sqrt(HEAD_DIM)
    sc = sc + add_mask[:, None, :, :]
    p = jax.nn.softmax(sc, axis=-1)
    ctx = jnp.einsum('bhqk,bhkd->bhqd', p, vh).transpose(0, 2, 1, 3).reshape(B, S, H)
    attn_out = ctx @ wo + bo
    h1 = _layer_norm(attn_out + x, g1, b1)
    inter = _gelu(h1 @ wi + bi)
    ffn = inter @ wo2 + bo2
    return _layer_norm(ffn + h1, g2, b2)


def bert_encoder_ref(hidden_states, attention_mask, scc_params):
    add_mask = ((1.0 - attention_mask) * -10000.0).astype(hidden_states.dtype)
    add_mask = add_mask.reshape(B, 1, S)
    for layer_params in scc_params:
        hidden_states = bert_layer_ref(hidden_states, add_mask, layer_params)
    return hidden_states


# ---- deterministic parameter init --------------------------------------------
def init_layer_params(key):
    ks = jax.random.split(key, 6)

    def lin(k, din, dout):
        w = (jax.random.normal(k, (din, dout), jnp.float32) * 0.02)
        b = jnp.zeros((1, dout), jnp.float32)
        return w, b

    wq, bq = lin(ks[0], H, H)
    wk, bk = lin(ks[1], H, H)
    wv, bv = lin(ks[2], H, H)
    wo, bo = lin(ks[3], H, H)
    g1, b1 = jnp.ones((1, H), jnp.float32), jnp.zeros((1, H), jnp.float32)
    wi, bi = lin(ks[4], H, INTERMEDIATE)
    wo2, bo2 = lin(ks[5], INTERMEDIATE, H)
    g2, b2 = jnp.ones((1, H), jnp.float32), jnp.zeros((1, H), jnp.float32)
    return (wq, bq, wk, bk, wv, bv, wo, bo, g1, b1, wi, bi, wo2, bo2, g2, b2)


if __name__ == "__main__":
    key = jax.random.PRNGKey(0)
    keys = jax.random.split(key, 1 + SCC_N_LAYER)
    x = jax.random.normal(keys[0], (B, S, H), jnp.float32)

    attention_mask = jnp.ones((B, S), jnp.float32)
    attention_mask = attention_mask.at[1, -4:].set(0.0)   # exercise masking

    scc_params = [init_layer_params(k) for k in keys[1:]]

    out = bert_encoder_forward(x, attention_mask, scc_params)
    out = jax.block_until_ready(out)

    ref = bert_encoder_ref(x, attention_mask, scc_params)
    max_err = float(jnp.max(jnp.abs(out - ref)))
    # bf16-matmul / f32-accumulate kernel vs. pure-f32 reference -> loosened tolerance
    assert jnp.allclose(out, ref, atol=2e-2, rtol=2e-2), f"max_err={max_err}"

    print("KERNEL_OK")
</pallas_src>

<mosaic_0001>
module attributes {stable_mosaic.version = 11 : i64} {
  func.func @bert_encoder_kernel(%arg0: i32, %arg1: i32, %arg2: memref<1x16x64xf32, #tpu.memory_space<vmem>>, %arg3: memref<1x1x16xf32, #tpu.memory_space<vmem>>, %arg4: memref<1x64x192xbf16, #tpu.memory_space<vmem>>, %arg5: memref<1x1x192xf32, #tpu.memory_space<vmem>>, %arg6: memref<1x64x64xbf16, #tpu.memory_space<vmem>>, %arg7: memref<1x1x64xf32, #tpu.memory_space<vmem>>, %arg8: memref<1x1x64xf32, #tpu.memory_space<vmem>>, %arg9: memref<1x1x64xf32, #tpu.memory_space<vmem>>, %arg10: memref<1x64x128xbf16, #tpu.memory_space<vmem>>, %arg11: memref<1x1x128xf32, #tpu.memory_space<vmem>>, %arg12: memref<1x128x64xbf16, #tpu.memory_space<vmem>>, %arg13: memref<1x1x64xf32, #tpu.memory_space<vmem>>, %arg14: memref<1x1x64xf32, #tpu.memory_space<vmem>>, %arg15: memref<1x1x64xf32, #tpu.memory_space<vmem>>, %arg16: memref<1x16x64xf32, #tpu.memory_space<vmem>>) attributes {dimension_semantics = [#tpu.dimension_semantics<parallel>, #tpu.dimension_semantics<arbitrary>], iteration_bounds = array<i64: 2, 2>, scalar_prefetch = 0 : i64, scratch_operands = 0 : i64, tpu.core_type = #tpu.core_type<tc>, window_params = [{transform_indices = @transform_0, window_bounds = array<i64: 1, 16, 64>}, {transform_indices = @transform_1, window_bounds = array<i64: 1, 1, 16>}, {transform_indices = @transform_2, window_bounds = array<i64: 1, 64, 192>}, {transform_indices = @transform_3, window_bounds = array<i64: 1, 1, 192>}, {transform_indices = @transform_4, window_bounds = array<i64: 1, 64, 64>}, {transform_indices = @transform_5, window_bounds = array<i64: 1, 1, 64>}, {transform_indices = @transform_6, window_bounds = array<i64: 1, 1, 64>}, {transform_indices = @transform_7, window_bounds = array<i64: 1, 1, 64>}, {transform_indices = @transform_8, window_bounds = array<i64: 1, 64, 128>}, {transform_indices = @transform_9, window_bounds = array<i64: 1, 1, 128>}, {transform_indices = @transform_10, window_bounds = array<i64: 1, 128, 64>}, {transform_indices = @transform_11, window_bounds = array<i64: 1, 1, 64>}, {transform_indices = @transform_12, window_bounds = array<i64: 1, 1, 64>}, {transform_indices = @transform_13, window_bounds = array<i64: 1, 1, 64>}, {transform_indices = @transform_14, window_bounds = array<i64: 1, 16, 64>}]} {
    %c0_i32 = arith.constant 0 : i32
    %0 = arith.cmpi eq, %arg1, %c0_i32 : i32
    %1 = arith.extui %0 : i1 to i32
    %c0_i32_0 = arith.constant 0 : i32
    %2 = arith.cmpi ne, %1, %c0_i32_0 : i32
    scf.if %2 {
      %c0_78 = arith.constant 0 : index
      %c0_79 = arith.constant 0 : index
      %c0_80 = arith.constant 0 : index
      %183 = vector.load %arg2[%c0_78, %c0_79, %c0_80] : memref<1x16x64xf32, #tpu.memory_space<vmem>>, vector<1x16x64xf32>
      %184 = vector.shape_cast %183 : vector<1x16x64xf32> to vector<16x64xf32>
      %c0_81 = arith.constant 0 : index
      %c0_82 = arith.constant 0 : index
      %c0_83 = arith.constant 0 : index
      %185 = vector.load %arg16[%c0_81, %c0_82, %c0_83] : memref<1x16x64xf32, #tpu.memory_space<vmem>>, vector<1x16x64xf32>
      %186 = vector.shape_cast %185 : vector<1x16x64xf32> to vector<16x64xf32>
      %187 = vector.shape_cast %184 : vector<16x64xf32> to vector<1x16x64xf32>
      tpu.vector_store %arg16[%c0_81, %c0_82, %c0_83], %187 {strides = array<i32>} : memref<1x16x64xf32, #tpu.memory_space<vmem>>, vector<1x16x64xf32>,
    } else {
    }
    %c0 = arith.constant 0 : index
    %c0_1 = arith.constant 0 : index
    %c0_2 = arith.constant 0 : index
    %3 = vector.load %arg16[%c0, %c0_1, %c0_2] : memref<1x16x64xf32, #tpu.memory_space<vmem>>, vector<1x16x64xf32>
    %4 = vector.shape_cast %3 : vector<1x16x64xf32> to vector<16x64xf32>
    %c0_3 = arith.constant 0 : index
    %c0_4 = arith.constant 0 : index
    %c0_5 = arith.constant 0 : index
    %5 = vector.load %arg3[%c0_3, %c0_4, %c0_5] : memref<1x1x16xf32, #tpu.memory_space<vmem>>, vector<1x1x16xf32>
    %6 = vector.shape_cast %5 : vector<1x1x16xf32> to vector<1x16xf32>
    %7 = arith.truncf %4 : vector<16x64xf32> to vector<16x64xbf16>
    %c0_6 = arith.constant 0 : index
    %c0_7 = arith.constant 0 : index
    %c0_8 = arith.constant 0 : index
    %8 = vector.load %arg4[%c0_6, %c0_7, %c0_8] : memref<1x64x192xbf16, #tpu.memory_space<vmem>>, vector<1x64x192xbf16>
    %9 = vector.shape_cast %8 : vector<1x64x192xbf16> to vector<64x192xbf16>
    %cst = arith.constant dense<0.000000e+00> : vector<16x192xf32>
    %10 = tpu.matmul %7, %9, %cst {dimension_numbers = #tpu.dot_dimension_numbers<[1], [0], [0], [1], [0, 0, 1, 1], [], []>} : vector<16x64xbf16>, vector<64x192xbf16>, vector<16x192xf32> -> vector<16x192xf32>
    %c0_9 = arith.constant 0 : index
    %c0_10 = arith.constant 0 : index
    %c0_11 = arith.constant 0 : index
    %11 = vector.load %arg5[%c0_9, %c0_10, %c0_11] : memref<1x1x192xf32, #tpu.memory_space<vmem>>, vector<1x1x192xf32>
    %12 = vector.shape_cast %11 : vector<1x1x192xf32> to vector<1x192xf32>
    %13 = vector.broadcast %12 : vector<1x192xf32> to vector<16x192xf32>
    %14 = arith.addf %10, %13 : vector<16x192xf32>
    %15 = arith.truncf %14 : vector<16x192xf32> to vector<16x192xbf16>
    %16 = vector.extract_strided_slice %15 {offsets = [0, 0], sizes = [16, 16], strides = [1, 1]} : vector<16x192xbf16> to vector<16x16xbf16>
    %17 = vector.extract_strided_slice %15 {offsets = [0, 64], sizes = [16, 16], strides = [1, 1]} : vector<16x192xbf16> to vector<16x16xbf16>
    %18 = vector.extract_strided_slice %15 {offsets = [0, 128], sizes = [16, 16], strides = [1, 1]} : vector<16x192xbf16> to vector<16x16xbf16>
    %cst_12 = arith.constant dense<0.000000e+00> : vector<16x16xf32>
    %19 = tpu.matmul %16, %17, %cst_12 {dimension_numbers = #tpu.dot_dimension_numbers<[1], [1], [0], [0], [0, 0, 1, 0], [], []>} : vector<16x16xbf16>, vector<16x16xbf16>, vector<16x16xf32> -> vector<16x16xf32>
    %20 = vector.broadcast %6 : vector<1x16xf32> to vector<16x16xf32>
    %21 = arith.addf %19, %20 : vector<16x16xf32>
    %cst_13 = arith.constant dense<0xFF800000> : vector<16xf32>
    %22 = vector.multi_reduction <maximumf>, %21, %cst_13 [1] : vector<16x16xf32> to vector<16xf32>
    %23 = vector.shape_cast %22 : vector<16xf32> to vector<16x1xf32>
    %24 = vector.broadcast %23 : vector<16x1xf32> to vector<16x16xf32>
    %25 = arith.subf %21, %24 : vector<16x16xf32>
    %26 = math.exp %25 : vector<16x16xf32>
    %cst_14 = arith.constant dense<0.000000e+00> : vector<16xf32>
    %27 = vector.multi_reduction <add>, %26, %cst_14 [1] : vector<16x16xf32> to vector<16xf32>
    %28 = vector.shape_cast %27 : vector<16xf32> to vector<16x1xf32>
    %29 = tpu.reciprocal %28 {approx = true} : vector<16x1xf32> -> vector<16x1xf32>
    %30 = vector.broadcast %29 : vector<16x1xf32> to vector<16x16xf32>
    %31 = arith.mulf %26, %30 : vector<16x16xf32>
    %32 = arith.truncf %31 : vector<16x16xf32> to vector<16x16xbf16>
    %cst_15 = arith.constant dense<0.000000e+00> : vector<16x16xf32>
    %33 = tpu.matmul %32, %18, %cst_15 {dimension_numbers = #tpu.dot_dimension_numbers<[1], [0], [0], [1], [0, 0, 1, 1], [], []>} : vector<16x16xbf16>, vector<16x16xbf16>, vector<16x16xf32> -> vector<16x16xf32>
    %34 = vector.extract_strided_slice %15 {offsets = [0, 16], sizes = [16, 16], strides = [1, 1]} : vector<16x192xbf16> to vector<16x16xbf16>
    %35 = vector.extract_strided_slice %15 {offsets = [0, 80], sizes = [16, 16], strides = [1, 1]} : vector<16x192xbf16> to vector<16x16xbf16>
    %36 = vector.extract_strided_slice %15 {offsets = [0, 144], sizes = [16, 16], strides = [1, 1]} : vector<16x192xbf16> to vector<16x16xbf16>
    %cst_16 = arith.constant dense<0.000000e+00> : vector<16x16xf32>
    %37 = tpu.matmul %34, %35, %cst_16 {dimension_numbers = #tpu.dot_dimension_numbers<[1], [1], [0], [0], [0, 0, 1, 0], [], []>} : vector<16x16xbf16>, vector<16x16xbf16>, vector<16x16xf32> -> vector<16x16xf32>
    %38 = vector.broadcast %6 : vector<1x16xf32> to vector<16x16xf32>
    %39 = arith.addf %37, %38 : vector<16x16xf32>
    %cst_17 = arith.constant dense<0xFF800000> : vector<16xf32>
    %40 = vector.multi_reduction <maximumf>, %39, %cst_17 [1] : vector<16x16xf32> to vector<16xf32>
    %41 = vector.shape_cast %40 : vector<16xf32> to vector<16x1xf32>
    %42 = vector.broadcast %41 : vector<16x1xf32> to vector<16x16xf32>
    %43 = arith.subf %39, %42 : vector<16x16xf32>
    %44 = math.exp %43 : vector<16x16xf32>
    %cst_18 = arith.constant dense<0.000000e+00> : vector<16xf32>
    %45 = vector.multi_reduction <add>, %44, %cst_18 [1] : vector<16x16xf32> to vector<16xf32>
    %46 = vector.shape_cast %45 : vector<16xf32> to vector<16x1xf32>
    %47 = tpu.reciprocal %46 {approx = true} : vector<16x1xf32> -> vector<16x1xf32>
    %48 = vector.broadcast %47 : vector<16x1xf32> to vector<16x16xf32>
    %49 = arith.mulf %44, %48 : vector<16x16xf32>
    %50 = arith.truncf %49 : vector<16x16xf32> to vector<16x16xbf16>
    %cst_19 = arith.constant dense<0.000000e+00> : vector<16x16xf32>
    %51 = tpu.matmul %50, %36, %cst_19 {dimension_numbers = #tpu.dot_dimension_numbers<[1], [0], [0], [1], [0, 0, 1, 1], [], []>} : vector<16x16xbf16>, vector<16x16xbf16>, vector<16x16xf32> -> vector<16x16xf32>
    %52 = vector.extract_strided_slice %15 {offsets = [0, 32], sizes = [16, 16], strides = [1, 1]} : vector<16x192xbf16> to vector<16x16xbf16>
    %53 = vector.extract_strided_slice %15 {offsets = [0, 96], sizes = [16, 16], strides = [1, 1]} : vector<16x192xbf16> to vector<16x16xbf16>
    %54 = vector.extract_strided_slice %15 {offsets = [0, 160], sizes = [16, 16], strides = [1, 1]} : vector<16x192xbf16> to vector<16x16xbf16>
    %cst_20 = arith.constant dense<0.000000e+00> : vector<16x16xf32>
    %55 = tpu.matmul %52, %53, %cst_20 {dimension_numbers = #tpu.dot_dimension_numbers<[1], [1], [0], [0], [0, 0, 1, 0], [], []>} : vector<16x16xbf16>, vector<16x16xbf16>, vector<16x16xf32> -> vector<16x16xf32>
    %56 = vector.broadcast %6 : vector<1x16xf32> to vector<16x16xf32>
    %57 = arith.addf %55, %56 : vector<16x16xf32>
    %cst_21 = arith.constant dense<0xFF800000> : vector<16xf32>
    %58 = vector.multi_reduction <maximumf>, %57, %cst_21 [1] : vector<16x16xf32> to vector<16xf32>
    %59 = vector.shape_cast %58 : vector<16xf32> to vector<16x1xf32>
    %60 = vector.broadcast %59 : vector<16x1xf32> to vector<16x16xf32>
    %61 = arith.subf %57, %60 : vector<16x16xf32>
    %62 = math.exp %61 : vector<16x16xf32>
    %cst_22 = arith.constant dense<0.000000e+00> : vector<16xf32>
    %63 = vector.multi_reduction <add>, %62, %cst_22 [1] : vector<16x16xf32> to vector<16xf32>
    %64 = vector.shape_cast %63 : vector<16xf32> to vector<16x1xf32>
    %65 = tpu.reciprocal %64 {approx = true} : vector<16x1xf32> -> vector<16x1xf32>
    %66 = vector.broadcast %65 : vector<16x1xf32> to vector<16x16xf32>
    %67 = arith.mulf %62, %66 : vector<16x16xf32>
    %68 = arith.truncf %67 : vector<16x16xf32> to vector<16x16xbf16>
    %cst_23 = arith.constant dense<0.000000e+00> : vector<16x16xf32>
    %69 = tpu.matmul %68, %54, %cst_23 {dimension_numbers = #tpu.dot_dimension_numbers<[1], [0], [0], [1], [0, 0, 1, 1], [], []>} : vector<16x16xbf16>, vector<16x16xbf16>, vector<16x16xf32> -> vector<16x16xf32>
    %70 = vector.extract_strided_slice %15 {offsets = [0, 48], sizes = [16, 16], strides = [1, 1]} : vector<16x192xbf16> to vector<16x16xbf16>
    %71 = vector.extract_strided_slice %15 {offsets = [0, 112], sizes = [16, 16], strides = [1, 1]} : vector<16x192xbf16> to vector<16x16xbf16>
    %72 = vector.extract_strided_slice %15 {offsets = [0, 176], sizes = [16, 16], strides = [1, 1]} : vector<16x192xbf16> to vector<16x16xbf16>
    %cst_24 = arith.constant dense<0.000000e+00> : vector<16x16xf32>
    %73 = tpu.matmul %70, %71, %cst_24 {dimension_numbers = #tpu.dot_dimension_numbers<[1], [1], [0], [0], [0, 0, 1, 0], [], []>} : vector<16x16xbf16>, vector<16x16xbf16>, vector<16x16xf32> -> vector<16x16xf32>
    %74 = vector.broadcast %6 : vector<1x16xf32> to vector<16x16xf32>
    %75 = arith.addf %73, %74 : vector<16x16xf32>
    %cst_25 = arith.constant dense<0xFF800000> : vector<16xf32>
    %76 = vector.multi_reduction <maximumf>, %75, %cst_25 [1] : vector<16x16xf32> to vector<16xf32>
    %77 = vector.shape_cast %76 : vector<16xf32> to vector<16x1xf32>
    %78 = vector.broadcast %77 : vector<16x1xf32> to vector<16x16xf32>
    %79 = arith.subf %75, %78 : vector<16x16xf32>
    %80 = math.exp %79 : vector<16x16xf32>
    %cst_26 = arith.constant dense<0.000000e+00> : vector<16xf32>
    %81 = vector.multi_reduction <add>, %80, %cst_26 [1] : vector<16x16xf32> to vector<16xf32>
    %82 = vector.shape_cast %81 : vector<16xf32> to vector<16x1xf32>
    %83 = tpu.reciprocal %82 {approx = true} : vector<16x1xf32> -> vector<16x1xf32>
    %84 = vector.broadcast %83 : vector<16x1xf32> to vector<16x16xf32>
    %85 = arith.mulf %80, %84 : vector<16x16xf32>
    %86 = arith.truncf %85 : vector<16x16xf32> to vector<16x16xbf16>
    %cst_27 = arith.constant dense<0.000000e+00> : vector<16x16xf32>
    %87 = tpu.matmul %86, %72, %cst_27 {dimension_numbers = #tpu.dot_dimension_numbers<[1], [0], [0], [1], [0, 0, 1, 1], [], []>} : vector<16x16xbf16>, vector<16x16xbf16>, vector<16x16xf32> -> vector<16x16xf32>
    %88 = tpu.concatenate %33, %51, %69, %87 in 1 : vector<16x16xf32>, vector<16x16xf32>, vector<16x16xf32>, vector<16x16xf32> -> vector<16x64xf32>
    %89 = arith.truncf %88 : vector<16x64xf32> to vector<16x64xbf16>
    %c0_28 = arith.constant 0 : index
    %c0_29 = arith.constant 0 : index
    %c0_30 = arith.constant 0 : index
    %90 = vector.load %arg6[%c0_28, %c0_29, %c0_30] : memref<1x64x64xbf16, #tpu.memory_space<vmem>>, vector<1x64x64xbf16>
    %91 = vector.shape_cast %90 : vector<1x64x64xbf16> to vector<64x64xbf16>
    %cst_31 = arith.constant dense<0.000000e+00> : vector<16x64xf32>
    %92 = tpu.matmul %89, %91, %cst_31 {dimension_numbers = #tpu.dot_dimension_numbers<[1], [0], [0], [1], [0, 0, 1, 1], [], []>} : vector<16x64xbf16>, vector<64x64xbf16>, vector<16x64xf32> -> vector<16x64xf32>
    %c0_32 = arith.constant 0 : index
    %c0_33 = arith.constant 0 : index
    %c0_34 = arith.constant 0 : index
    %93 = vector.load %arg7[%c0_32, %c0_33, %c0_34] : memref<1x1x64xf32, #tpu.memory_space<vmem>>, vector<1x1x64xf32>
    %94 = vector.shape_cast %93 : vector<1x1x64xf32> to vector<1x64xf32>
    %95 = vector.broadcast %94 : vector<1x64xf32> to vector<16x64xf32>
    %96 = arith.addf %92, %95 : vector<16x64xf32>
    %97 = arith.addf %96, %4 : vector<16x64xf32>
    %c0_35 = arith.constant 0 : index
    %c0_36 = arith.constant 0 : index
    %c0_37 = arith.constant 0 : index
    %98 = vector.load %arg8[%c0_35, %c0_36, %c0_37] : memref<1x1x64xf32, #tpu.memory_space<vmem>>, vector<1x1x64xf32>
    %99 = vector.shape_cast %98 : vector<1x1x64xf32> to vector<1x64xf32>
    %c0_38 = arith.constant 0 : index
    %c0_39 = arith.constant 0 : index
    %c0_40 = arith.constant 0 : index
    %100 = vector.load %arg9[%c0_38, %c0_39, %c0_40] : memref<1x1x64xf32, #tpu.memory_space<vmem>>, vector<1x1x64xf32>
    %101 = vector.shape_cast %100 : vector<1x1x64xf32> to vector<1x64xf32>
    %cst_41 = arith.constant dense<0.000000e+00> : vector<16xf32>
    %102 = vector.multi_reduction <add>, %97, %cst_41 [1] : vector<16x64xf32> to vector<16xf32>
    %103 = vector.shape_cast %102 : vector<16xf32> to vector<16x1xf32>
    %cst_42 = arith.constant 6.400000e+01 : f32
    %104 = vector.broadcast %cst_42 : f32 to vector<16x1xf32>
    %105 = arith.divf %103, %104 : vector<16x1xf32>
    %106 = vector.broadcast %105 : vector<16x1xf32> to vector<16x64xf32>
    %107 = arith.subf %97, %106 : vector<16x64xf32>
    %108 = arith.mulf %107, %107 : vector<16x64xf32>
    %cst_43 = arith.constant dense<0.000000e+00> : vector<16xf32>
    %109 = vector.multi_reduction <add>, %108, %cst_43 [1] : vector<16x64xf32> to vector<16xf32>
    %110 = vector.shape_cast %109 : vector<16xf32> to vector<16x1xf32>
    %cst_44 = arith.constant 6.400000e+01 : f32
    %111 = vector.broadcast %cst_44 : f32 to vector<16x1xf32>
    %112 = arith.divf %110, %111 : vector<16x1xf32>
    %113 = vector.broadcast %105 : vector<16x1xf32> to vector<16x64xf32>
    %114 = arith.subf %97, %113 : vector<16x64xf32>
    %cst_45 = arith.constant 9.99999996E-13 : f32
    %115 = vector.broadcast %cst_45 : f32 to vector<16x1xf32>
    %116 = arith.addf %112, %115 : vector<16x1xf32>
    %117 = math.rsqrt %116 : vector<16x1xf32>
    %118 = vector.broadcast %117 : vector<16x1xf32> to vector<16x64xf32>
    %119 = arith.mulf %114, %118 : vector<16x64xf32>
    %120 = vector.broadcast %99 : vector<1x64xf32> to vector<16x64xf32>
    %121 = arith.mulf %119, %120 : vector<16x64xf32>
    %122 = vector.broadcast %101 : vector<1x64xf32> to vector<16x64xf32>
    %123 = arith.addf %121, %122 : vector<16x64xf32>
    %124 = arith.truncf %123 : vector<16x64xf32> to vector<16x64xbf16>
    %c0_46 = arith.constant 0 : index
    %c0_47 = arith.constant 0 : index
    %c0_48 = arith.constant 0 : index
    %125 = vector.load %arg10[%c0_46, %c0_47, %c0_48] : memref<1x64x128xbf16, #tpu.memory_space<vmem>>, vector<1x64x128xbf16>
    %126 = vector.shape_cast %125 : vector<1x64x128xbf16> to vector<64x128xbf16>
    %cst_49 = arith.constant dense<0.000000e+00> : vector<16x128xf32>
    %127 = tpu.matmul %124, %126, %cst_49 {dimension_numbers = #tpu.dot_dimension_numbers<[1], [0], [0], [1], [0, 0, 1, 1], [], []>} : vector<16x64xbf16>, vector<64x128xbf16>, vector<16x128xf32> -> vector<16x128xf32>
    %c0_50 = arith.constant 0 : index
    %c0_51 = arith.constant 0 : index
    %c0_52 = arith.constant 0 : index
    %128 = vector.load %arg11[%c0_50, %c0_51, %c0_52] : memref<1x1x128xf32, #tpu.memory_space<vmem>>, vector<1x1x128xf32>
    %129 = vector.shape_cast %128 : vector<1x1x128xf32> to vector<1x128xf32>
    %130 = vector.broadcast %129 : vector<1x128xf32> to vector<16x128xf32>
    %131 = arith.addf %127, %130 : vector<16x128xf32>
    %cst_53 = arith.constant 5.000000e-01 : f32
    %132 = vector.broadcast %cst_53 : f32 to vector<16x128xf32>
    %133 = arith.mulf %132, %131 : vector<16x128xf32>
    %cst_54 = arith.constant 4.471500e-02 : f32
    %134 = vector.broadcast %cst_54 : f32 to vector<16x128xf32>
    %135 = arith.mulf %134, %131 : vector<16x128xf32>
    %136 = arith.mulf %135, %131 : vector<16x128xf32>
    %137 = arith.mulf %136, %131 : vector<16x128xf32>
    %138 = arith.addf %131, %137 : vector<16x128xf32>
    %cst_55 = arith.constant 0.797884583 : f32
    %139 = vector.broadcast %cst_55 : f32 to vector<16x128xf32>
    %140 = arith.mulf %139, %138 : vector<16x128xf32>
    %141 = math.tanh %140 : vector<16x128xf32>
    %cst_56 = arith.constant 1.000000e+00 : f32
    %142 = vector.broadcast %cst_56 : f32 to vector<16x128xf32>
    %143 = arith.addf %142, %141 : vector<16x128xf32>
    %144 = arith.mulf %133, %143 : vector<16x128xf32>
    %145 = arith.truncf %144 : vector<16x128xf32> to vector<16x128xbf16>
    %c0_57 = arith.constant 0 : index
    %c0_58 = arith.constant 0 : index
    %c0_59 = arith.constant 0 : index
    %146 = vector.load %arg12[%c0_57, %c0_58, %c0_59] : memref<1x128x64xbf16, #tpu.memory_space<vmem>>, vector<1x128x64xbf16>
    %147 = vector.shape_cast %146 : vector<1x128x64xbf16> to vector<128x64xbf16>
    %cst_60 = arith.constant dense<0.000000e+00> : vector<16x64xf32>
    %148 = tpu.matmul %145, %147, %cst_60 {dimension_numbers = #tpu.dot_dimension_numbers<[1], [0], [0], [1], [0, 0, 1, 1], [], []>} : vector<16x128xbf16>, vector<128x64xbf16>, vector<16x64xf32> -> vector<16x64xf32>
    %c0_61 = arith.constant 0 : index
    %c0_62 = arith.constant 0 : index
    %c0_63 = arith.constant 0 : index
    %149 = vector.load %arg13[%c0_61, %c0_62, %c0_63] : memref<1x1x64xf32, #tpu.memory_space<vmem>>, vector<1x1x64xf32>
    %150 = vector.shape_cast %149 : vector<1x1x64xf32> to vector<1x64xf32>
    %151 = vector.broadcast %150 : vector<1x64xf32> to vector<16x64xf32>
    %152 = arith.addf %148, %151 : vector<16x64xf32>
    %153 = arith.addf %152, %123 : vector<16x64xf32>
    %c0_64 = arith.constant 0 : index
    %c0_65 = arith.constant 0 : index
    %c0_66 = arith.constant 0 : index
    %154 = vector.load %arg14[%c0_64, %c0_65, %c0_66] : memref<1x1x64xf32, #tpu.memory_space<vmem>>, vector<1x1x64xf32>
    %155 = vector.shape_cast %154 : vector<1x1x64xf32> to vector<1x64xf32>
    %c0_67 = arith.constant 0 : index
    %c0_68 = arith.constant 0 : index
    %c0_69 = arith.constant 0 : index
    %156 = vector.load %arg15[%c0_67, %c0_68, %c0_69] : memref<1x1x64xf32, #tpu.memory_space<vmem>>, vector<1x1x64xf32>
    %157 = vector.shape_cast %156 : vector<1x1x64xf32> to vector<1x64xf32>
    %cst_70 = arith.constant dense<0.000000e+00> : vector<16xf32>
    %158 = vector.multi_reduction <add>, %153, %cst_70 [1] : vector<16x64xf32> to vector<16xf32>
    %159 = vector.shape_cast %158 : vector<16xf32> to vector<16x1xf32>
    %cst_71 = arith.constant 6.400000e+01 : f32
    %160 = vector.broadcast %cst_71 : f32 to vector<16x1xf32>
    %161 = arith.divf %159, %160 : vector<16x1xf32>
    %162 = vector.broadcast %161 : vector<16x1xf32> to vector<16x64xf32>
    %163 = arith.subf %153, %162 : vector<16x64xf32>
    %164 = arith.mulf %163, %163 : vector<16x64xf32>
    %cst_72 = arith.constant dense<0.000000e+00> : vector<16xf32>
    %165 = vector.multi_reduction <add>, %164, %cst_72 [1] : vector<16x64xf32> to vector<16xf32>
    %166 = vector.shape_cast %165 : vector<16xf32> to vector<16x1xf32>
    %cst_73 = arith.constant 6.400000e+01 : f32
    %167 = vector.broadcast %cst_73 : f32 to vector<16x1xf32>
    %168 = arith.divf %166, %167 : vector<16x1xf32>
    %169 = vector.broadcast %161 : vector<16x1xf32> to vector<16x64xf32>
    %170 = arith.subf %153, %169 : vector<16x64xf32>
    %cst_74 = arith.constant 9.99999996E-13 : f32
    %171 = vector.broadcast %cst_74 : f32 to vector<16x1xf32>
    %172 = arith.addf %168, %171 : vector<16x1xf32>
    %173 = math.rsqrt %172 : vector<16x1xf32>
    %174 = vector.broadcast %173 : vector<16x1xf32> to vector<16x64xf32>
    %175 = arith.mulf %170, %174 : vector<16x64xf32>
    %176 = vector.broadcast %155 : vector<1x64xf32> to vector<16x64xf32>
    %177 = arith.mulf %175, %176 : vector<16x64xf32>
    %178 = vector.broadcast %157 : vector<1x64xf32> to vector<16x64xf32>
    %179 = arith.addf %177, %178 : vector<16x64xf32>
    %c0_75 = arith.constant 0 : index
    %c0_76 = arith.constant 0 : index
    %c0_77 = arith.constant 0 : index
    %180 = vector.load %arg16[%c0_75, %c0_76, %c0_77] : memref<1x16x64xf32, #tpu.memory_space<vmem>>, vector<1x16x64xf32>
    %181 = vector.shape_cast %180 : vector<1x16x64xf32> to vector<16x64xf32>
    %182 = vector.shape_cast %179 : vector<16x64xf32> to vector<1x16x64xf32>
    tpu.vector_store %arg16[%c0_75, %c0_76, %c0_77], %182 {strides = array<i32>} : memref<1x16x64xf32, #tpu.memory_space<vmem>>, vector<1x16x64xf32>,
    return
  }
  func.func @transform_0(%arg0: i32, %arg1: i32) -> (i32, i32, i32) {
    %c0_i32 = arith.constant 0 : i32
    %c0_i32_0 = arith.constant 0 : i32
    %c0_i32_1 = arith.constant 0 : i32
    return %arg0, %c0_i32, %c0_i32_0 : i32, i32, i32
  }
  func.func @transform_1(%arg0: i32, %arg1: i32) -> (i32, i32, i32) {
    %c0_i32 = arith.constant 0 : i32
    %c0_i32_0 = arith.constant 0 : i32
    %c0_i32_1 = arith.constant 0 : i32
    return %arg0, %c0_i32, %c0_i32_0 : i32, i32, i32
  }
  func.func @transform_2(%arg0: i32, %arg1: i32) -> (i32, i32, i32) {
    %c0_i32 = arith.constant 0 : i32
    %c0_i32_0 = arith.constant 0 : i32
    %c0_i32_1 = arith.constant 0 : i32
    return %arg1, %c0_i32, %c0_i32_0 : i32, i32, i32
  }
  func.func @transform_3(%arg0: i32, %arg1: i32) -> (i32, i32, i32) {
    %c0_i32 = arith.constant 0 : i32
    %c0_i32_0 = arith.constant 0 : i32
    %c0_i32_1 = arith.constant 0 : i32
    return %arg1, %c0_i32, %c0_i32_0 : i32, i32, i32
  }
  func.func @transform_4(%arg0: i32, %arg1: i32) -> (i32, i32, i32) {
    %c0_i32 = arith.constant 0 : i32
    %c0_i32_0 = arith.constant 0 : i32
    %c0_i32_1 = arith.constant 0 : i32
    return %arg1, %c0_i32, %c0_i32_0 : i32, i32, i32
  }
  func.func @transform_5(%arg0: i32, %arg1: i32) -> (i32, i32, i32) {
    %c0_i32 = arith.constant 0 : i32
    %c0_i32_0 = arith.constant 0 : i32
    %c0_i32_1 = arith.constant 0 : i32
    return %arg1, %c0_i32, %c0_i32_0 : i32, i32, i32
  }
  func.func @transform_6(%arg0: i32, %arg1: i32) -> (i32, i32, i32) {
    %c0_i32 = arith.constant 0 : i32
    %c0_i32_0 = arith.constant 0 : i32
    %c0_i32_1 = arith.constant 0 : i32
    return %arg1, %c0_i32, %c0_i32_0 : i32, i32, i32
  }
  func.func @transform_7(%arg0: i32, %arg1: i32) -> (i32, i32, i32) {
    %c0_i32 = arith.constant 0 : i32
    %c0_i32_0 = arith.constant 0 : i32
    %c0_i32_1 = arith.constant 0 : i32
    return %arg1, %c0_i32, %c0_i32_0 : i32, i32, i32
  }
  func.func @transform_8(%arg0: i32, %arg1: i32) -> (i32, i32, i32) {
    %c0_i32 = arith.constant 0 : i32
    %c0_i32_0 = arith.constant 0 : i32
    %c0_i32_1 = arith.constant 0 : i32
    return %arg1, %c0_i32, %c0_i32_0 : i32, i32, i32
  }
  func.func @transform_9(%arg0: i32, %arg1: i32) -> (i32, i32, i32) {
    %c0_i32 = arith.constant 0 : i32
    %c0_i32_0 = arith.constant 0 : i32
    %c0_i32_1 = arith.constant 0 : i32
    return %arg1, %c0_i32, %c0_i32_0 : i32, i32, i32
  }
  func.func @transform_10(%arg0: i32, %arg1: i32) -> (i32, i32, i32) {
    %c0_i32 = arith.constant 0 : i32
    %c0_i32_0 = arith.constant 0 : i32
    %c0_i32_1 = arith.constant 0 : i32
    return %arg1, %c0_i32, %c0_i32_0 : i32, i32, i32
  }
  func.func @transform_11(%arg0: i32, %arg1: i32) -> (i32, i32, i32) {
    %c0_i32 = arith.constant 0 : i32
    %c0_i32_0 = arith.constant 0 : i32
    %c0_i32_1 = arith.constant 0 : i32
    return %arg1, %c0_i32, %c0_i32_0 : i32, i32, i32
  }
  func.func @transform_12(%arg0: i32, %arg1: i32) -> (i32, i32, i32) {
    %c0_i32 = arith.constant 0 : i32
    %c0_i32_0 = arith.constant 0 : i32
    %c0_i32_1 = arith.constant 0 : i32
    return %arg1, %c0_i32, %c0_i32_0 : i32, i32, i32
  }
  func.func @transform_13(%arg0: i32, %arg1: i32) -> (i32, i32, i32) {
    %c0_i32 = arith.constant 0 : i32
    %c0_i32_0 = arith.constant 0 : i32
    %c0_i32_1 = arith.constant 0 : i32
    return %arg1, %c0_i32, %c0_i32_0 : i32, i32, i32
  }
  func.func @transform_14(%arg0: i32, %arg1: i32) -> (i32, i32, i32) {
    %c0_i32 = arith.constant 0 : i32
    %c0_i32_0 = arith.constant 0 : i32
    %c0_i32_1 = arith.constant 0 : i32
    return %arg0, %c0_i32, %c0_i32_0 : i32, i32, i32
  }
}

</mosaic_0001>

<llo_original>
// kernel: tpu_custom_call.1
$region0: #{tpu_custom_call.1}
  #allocation0 [shape = 'u32[]', space=smem, size = 0x4, offset = 0x4, fixed_abs, tag = 'smem constant byte address 0x4 - core index']
  #allocation1 [shape = 'u32[144,128]{1,0:T(1,128)}', space=vmem, size = 0x12000, scoped, tag = 'internal scratch']
  %s0 = inlined_call_operand.hbm [shape: f32[2,16,64], index: 0, kind: input, shape index: {}]
  %s1 = inlined_call_operand.vmem [shape: f32[2,1,16], index: 1, kind: input, shape index: {}]
  %s2 = inlined_call_operand.vmem [shape: bf16[2,64,192], index: 2, kind: input, shape index: {}]
  %s3 = inlined_call_operand.hbm [shape: f32[2,1,192], index: 3, kind: input, shape index: {}]
  %s4 = inlined_call_operand.vmem [shape: bf16[2,64,64], index: 4, kind: input, shape index: {}]
  %s5 = inlined_call_operand.vmem [shape: f32[2,1,64], index: 5, kind: input, shape index: {}]
  %s6 = inlined_call_operand.vmem [shape: f32[2,1,64], index: 6, kind: input, shape index: {}]
  %s7 = inlined_call_operand.vmem [shape: f32[2,1,64], index: 7, kind: input, shape index: {}]
  %s8 = inlined_call_operand.hbm [shape: bf16[2,64,128], index: 8, kind: input, shape index: {}]
  %s9 = inlined_call_operand.vmem [shape: f32[2,1,128], index: 9, kind: input, shape index: {}]
  %s10 = inlined_call_operand.vmem [shape: bf16[2,128,64], index: 10, kind: input, shape index: {}]
  %s11 = inlined_call_operand.vmem [shape: f32[2,1,64], index: 11, kind: input, shape index: {}]
  %s12 = inlined_call_operand.vmem [shape: f32[2,1,64], index: 12, kind: input, shape index: {}]
  %s13 = inlined_call_operand.vmem [shape: f32[2,1,64], index: 13, kind: input, shape index: {}]
  %s14 = inlined_call_operand.hbm [shape: f32[2,16,64], index: 14, kind: output, shape index: {}]
  %s15 = sld [smem:[#allocation0]]
  $region105: #{tpu_custom_call.1} parent=0
    _
  %s17 = ssub.s32 1, %s15
  %s18 = scalar_select 0, %s17, %s15
  $region1: #{tpu_custom_call.1} parent=0
    #allocation2 [shape = 'u8[16384]{0}', space=vmem, size = 0x4000, scoped, tag = 'input window, operand 0']
    #allocation3 [shape = 's32[2]{0}', space=sflag, size = 0x8, scoped, tag = 'scoped memory for tpu_custom_call.1']
    #allocation4 [shape = 's32[2]{0}', space=sflag, size = 0x8, scoped, tag = 'scoped memory for tpu_custom_call.1']
    #allocation5 [shape = 'u8[2048]{0}', space=vmem, size = 0x800, scoped, tag = 'input window, operand 3']
    #allocation6 [shape = 's32[2]{0}', space=sflag, size = 0x8, scoped, tag = 'scoped memory for tpu_custom_call.1']
    #allocation7 [shape = 'u8[32768]{0}', space=vmem, size = 0x8000, scoped, tag = 'input window, operand 8']
    #allocation8 [shape = 'u8[16384]{0}', space=vmem, size = 0x4000, scoped, tag = 'output window, operand 0']
    %19 = vsyncpa [#allocation3], 0
    %s20 = scalar_lea.sflag [#allocation3], 1
    %21 = vsyncpa %s20, 0
    %22 = vsyncpa [#allocation6], 0
    %s23 = scalar_lea.sflag [#allocation6], 1
    %24 = vsyncpa %s23, 0
    %25 = vsyncpa [#allocation4], 0
    %s26 = scalar_lea.sflag [#allocation4], 1
    %27 = vsyncpa %s26, 0
    loop: start=0, step=1, limit=6
    $region2: #{tpu_custom_call.1} parent=1 // loop_pre_header
      _
    $region3: #{tpu_custom_call.1} parent=1 // loop_header
      %s29 = sphi 0, %s33
      %p30 = scmp.ge.s32.totalorder %s29, 6
      %s36 = sphi 0, %s48
      %s37 = sphi 0, %s44
      %s38 = sphi 0, %s36
      %s39 = sphi 0, %s37
      %s40 = sphi 0, %s38
      %s41 = sphi 0, %s39
      %s51 = sphi 0, %s53
      %s54 = sphi 0, %s51
      %s55 = sphi 0, %s54
      %s71 = sphi 0, %s55
      %s77 = sphi 0, %s79
      %s80 = sphi 0, %s77
      %s81 = sphi 0, %s80
      %s97 = sphi 0, %s81
      %s103 = sphi 0, %s105
      %s106 = sphi 0, %s103
      %s107 = sphi 0, %s106
      %s123 = sphi 0, %s107
      %s129 = sphi 0, %s131
      %s132 = sphi 0, %s129
      %s133 = sphi 0, %s132
      %s149 = sphi 0, %s133
      %s155 = sphi 0, %s157
      %s158 = sphi 0, %s155
      %s159 = sphi 0, %s158
      %s175 = sphi 0, %s159
      %s181 = sphi 0, %s183
      %s184 = sphi 0, %s181
      %s185 = sphi 0, %s184
      %s201 = sphi 0, %s185
      %s207 = sphi 0, %s209
      %s210 = sphi 0, %s207
      %s211 = sphi 0, %s210
      %s227 = sphi 0, %s211
      %s233 = sphi 0, %s235
      %s236 = sphi 0, %s233
      %s237 = sphi 0, %s236
      %s253 = sphi 0, %s237
      %s259 = sphi 0, %s261
      %s262 = sphi 0, %s259
      %s263 = sphi 0, %s262
      %s279 = sphi 0, %s263
      %s285 = sphi 0, %s287
      %s288 = sphi 0, %s285
      %s289 = sphi 0, %s288
      %s305 = sphi 0, %s289
      %s311 = sphi 0, %s313
      %s314 = sphi 0, %s311
      %s315 = sphi 0, %s314
      %s331 = sphi 0, %s315
      %s337 = sphi 0, %s339
      %s340 = sphi 0, %s337
      %s341 = sphi 0, %s340
      %s357 = sphi 0, %s341
      %s363 = sphi 0, %s365
      %s366 = sphi 0, %s363
      %s367 = sphi 0, %s366
      %s383 = sphi 0, %s367
      %s389 = sphi 0, %s391
      %s392 = sphi 0, %s389
      %s393 = sphi 0, %s392
      %s409 = sphi 0, %s393
      %s415 = sphi 0, %s417
      %s418 = sphi 0, %s415
      %s419 = sphi 0, %s418
      %s435 = sphi 0, %s419
    $region4: #{tpu_custom_call.1} parent=1 // loop_header_branch
      %32 = sbr.rel (%p30) target = $region8
    $region5: #{tpu_custom_call.1} parent=1 // loop_body
      %s34 = ssub.s32 %s29, 1
      %s35 = ssub.s32 %s29, 2
      %s42 = sadd.s32 1, %s37
      %p43 = scmp.ge.s32.totalorder %s42, 2
      %s44 = scalar_select %p43, 0, %s42
      %s45 = sadd.s32 1, %s36
      %s46 = scalar_select %p43, %s45, %s36
      %p47 = scmp.ge.s32.totalorder %s46, 2
      %s48 = scalar_select %p47, 0, %s46
      %s49 = ssub.s32 %s36, %s48
      %p50 = scmp.eq.s32.totalorder %s49, 0
      %s52 = sadd.s32 %s51, 1
      %s53 = scalar_select %p50, %s51, %s52
      %p56 = pneg %p50
      %p57 = scmp.eq.s32.totalorder %s29, 3
      %p58 = por %p56, %p57
      %p59 = scmp.ne.s32.totalorder %s51, %s54
      %p60 = scmp.eq.s32.totalorder %s29, 0
      %p61 = por %p59, %p60
      %p62 = scmp.ne.s32.totalorder %s51, %s54
      %p63 = scmp.eq.s32.totalorder %s34, 3
      %p64 = por %p62, %p63
      %p65 = scmp.ne.s32.totalorder %s54, %s55
      %p66 = scmp.eq.s32.totalorder %s34, 0
      %p67 = por %p65, %p66
      %p68 = scmp.ne.s32.totalorder %s54, %s55
      %p69 = scmp.eq.s32.totalorder %s35, 3
      %p70 = por %p68, %p69
      %p72 = scmp.ne.s32.totalorder %s55, %s71
      %p73 = scmp.eq.s32.totalorder %s35, 0
      %p74 = por %p72, %p73
      %s75 = ssub.s32 %s36, %s48
      %p76 = scmp.eq.s32.totalorder %s75, 0
      %s78 = sadd.s32 %s77, 1
      %s79 = scalar_select %p76, %s77, %s78
      %p82 = pneg %p76
      %p83 = scmp.eq.s32.totalorder %s29, 3
      %p84 = por %p82, %p83
      %p85 = scmp.ne.s32.totalorder %s77, %s80
      %p86 = scmp.eq.s32.totalorder %s29, 0
      %p87 = por %p85, %p86
      %p88 = scmp.ne.s32.totalorder %s77, %s80
      %p89 = scmp.eq.s32.totalorder %s34, 3
      %p90 = por %p88, %p89
      %p91 = scmp.ne.s32.totalorder %s80, %s81
      %p92 = scmp.eq.s32.totalorder %s34, 0
      %p93 = por %p91, %p92
      %p94 = scmp.ne.s32.totalorder %s80, %s81
      %p95 = scmp.eq.s32.totalorder %s35, 3
      %p96 = por %p94, %p95
      %p98 = scmp.ne.s32.totalorder %s81, %s97
      %p99 = scmp.eq.s32.totalorder %s35, 0
      %p100 = por %p98, %p99
      %s101 = ssub.s32 %s37, %s44
      %p102 = scmp.eq.s32.totalorder %s101, 0
      %s104 = sadd.s32 %s103, 1
      %s105 = scalar_select %p102, %s103, %s104
      %p108 = pneg %p102
      %p109 = scmp.eq.s32.totalorder %s29, 3
      %p110 = por %p108, %p109
      %p111 = scmp.ne.s32.totalorder %s103, %s106
      %p112 = scmp.eq.s32.totalorder %s29, 0
      %p113 = por %p111, %p112
      %p114 = scmp.ne.s32.totalorder %s103, %s106
      %p115 = scmp.eq.s32.totalorder %s34, 3
      %p116 = por %p114, %p115
      %p117 = scmp.ne.s32.totalorder %s106, %s107
      %p118 = scmp.eq.s32.totalorder %s34, 0
      %p119 = por %p117, %p118
      %p120 = scmp.ne.s32.totalorder %s106, %s107
      %p121 = scmp.eq.s32.totalorder %s35, 3
      %p122 = por %p120, %p121
      %p124 = scmp.ne.s32.totalorder %s107, %s123
      %p125 = scmp.eq.s32.totalorder %s35, 0
      %p126 = por %p124, %p125
      %s127 = ssub.s32 %s37, %s44
      %p128 = scmp.eq.s32.totalorder %s127, 0
      %s130 = sadd.s32 %s129, 1
      %s131 = scalar_select %p128, %s129, %s130
      %p134 = pneg %p128
      %p135 = scmp.eq.s32.totalorder %s29, 3
      %p136 = por %p134, %p135
      %p137 = scmp.ne.s32.totalorder %s129, %s132
      %p138 = scmp.eq.s32.totalorder %s29, 0
      %p139 = por %p137, %p138
      %p140 = scmp.ne.s32.totalorder %s129, %s132
      %p141 = scmp.eq.s32.totalorder %s34, 3
      %p142 = por %p140, %p141
      %p143 = scmp.ne.s32.totalorder %s132, %s133
      %p144 = scmp.eq.s32.totalorder %s34, 0
      %p145 = por %p143, %p144
      %p146 = scmp.ne.s32.totalorder %s132, %s133
      %p147 = scmp.eq.s32.totalorder %s35, 3
      %p148 = por %p146, %p147
      %p150 = scmp.ne.s32.totalorder %s133, %s149
      %p151 = scmp.eq.s32.totalorder %s35, 0
      %p152 = por %p150, %p151
      %s153 = ssub.s32 %s37, %s44
      %p154 = scmp.eq.s32.totalorder %s153, 0
      %s156 = sadd.s32 %s155, 1
      %s157 = scalar_select %p154, %s155, %s156
      %p160 = pneg %p154
      %p161 = scmp.eq.s32.totalorder %s29, 3
      %p162 = por %p160, %p161
      %p163 = scmp.ne.s32.totalorder %s155, %s158
      %p164 = scmp.eq.s32.totalorder %s29, 0
      %p165 = por %p163, %p164
      %p166 = scmp.ne.s32.totalorder %s155, %s158
      %p167 = scmp.eq.s32.totalorder %s34, 3
      %p168 = por %p166, %p167
      %p169 = scmp.ne.s32.totalorder %s158, %s159
      %p170 = scmp.eq.s32.totalorder %s34, 0
      %p171 = por %p169, %p170
      %p172 = scmp.ne.s32.totalorder %s158, %s159
      %p173 = scmp.eq.s32.totalorder %s35, 3
      %p174 = por %p172, %p173
      %p176 = scmp.ne.s32.totalorder %s159, %s175
      %p177 = scmp.eq.s32.totalorder %s35, 0
      %p178 = por %p176, %p177
      %s179 = ssub.s32 %s37, %s44
      %p180 = scmp.eq.s32.totalorder %s179, 0
      %s182 = sadd.s32 %s181, 1
      %s183 = scalar_select %p180, %s181, %s182
      %p186 = pneg %p180
      %p187 = scmp.eq.s32.totalorder %s29, 3
      %p188 = por %p186, %p187
      %p189 = scmp.ne.s32.totalorder %s181, %s184
      %p190 = scmp.eq.s32.totalorder %s29, 0
      %p191 = por %p189, %p190
      %p192 = scmp.ne.s32.totalorder %s181, %s184
      %p193 = scmp.eq.s32.totalorder %s34, 3
      %p194 = por %p192, %p193
      %p195 = scmp.ne.s32.totalorder %s184, %s185
      %p196 = scmp.eq.s32.totalorder %s34, 0
      %p197 = por %p195, %p196
      %p198 = scmp.ne.s32.totalorder %s184, %s185
      %p199 = scmp.eq.s32.totalorder %s35, 3
      %p200 = por %p198, %p199
      %p202 = scmp.ne.s32.totalorder %s185, %s201
      %p203 = scmp.eq.s32.totalorder %s35, 0
      %p204 = por %p202, %p203
      %s205 = ssub.s32 %s37, %s44
      %p206 = scmp.eq.s32.totalorder %s205, 0
      %s208 = sadd.s32 %s207, 1
      %s209 = scalar_select %p206, %s207, %s208
      %p212 = pneg %p206
      %p213 = scmp.eq.s32.totalorder %s29, 3
      %p214 = por %p212, %p213
      %p215 = scmp.ne.s32.totalorder %s207, %s210
      %p216 = scmp.eq.s32.totalorder %s29, 0
      %p217 = por %p215, %p216
      %p218 = scmp.ne.s32.totalorder %s207, %s210
      %p219 = scmp.eq.s32.totalorder %s34, 3
      %p220 = por %p218, %p219
      %p221 = scmp.ne.s32.totalorder %s210, %s211
      %p222 = scmp.eq.s32.totalorder %s34, 0
      %p223 = por %p221, %p222
      %p224 = scmp.ne.s32.totalorder %s210, %s211
      %p225 = scmp.eq.s32.totalorder %s35, 3
      %p226 = por %p224, %p225
      %p228 = scmp.ne.s32.totalorder %s211, %s227
      %p229 = scmp.eq.s32.totalorder %s35, 0
      %p230 = por %p228, %p229
      %s231 = ssub.s32 %s37, %s44
      %p232 = scmp.eq.s32.totalorder %s231, 0
      %s234 = sadd.s32 %s233, 1
      %s235 = scalar_select %p232, %s233, %s234
      %p238 = pneg %p232
      %p239 = scmp.eq.s32.totalorder %s29, 3
      %p240 = por %p238, %p239
      %p241 = scmp.ne.s32.totalorder %s233, %s236
      %p242 = scmp.eq.s32.totalorder %s29, 0
      %p243 = por %p241, %p242
      %p244 = scmp.ne.s32.totalorder %s233, %s236
      %p245 = scmp.eq.s32.totalorder %s34, 3
      %p246 = por %p244, %p245
      %p247 = scmp.ne.s32.totalorder %s236, %s237
      %p248 = scmp.eq.s32.totalorder %s34, 0
      %p249 = por %p247, %p248
      %p250 = scmp.ne.s32.totalorder %s236, %s237
      %p251 = scmp.eq.s32.totalorder %s35, 3
      %p252 = por %p250, %p251
      %p254 = scmp.ne.s32.totalorder %s237, %s253
      %p255 = scmp.eq.s32.totalorder %s35, 0
      %p256 = por %p254, %p255
      %s257 = ssub.s32 %s37, %s44
      %p258 = scmp.eq.s32.totalorder %s257, 0
      %s260 = sadd.s32 %s259, 1
      %s261 = scalar_select %p258, %s259, %s260
      %p264 = pneg %p258
      %p265 = scmp.eq.s32.totalorder %s29, 3
      %p266 = por %p264, %p265
      %p267 = scmp.ne.s32.totalorder %s259, %s262
      %p268 = scmp.eq.s32.totalorder %s29, 0
      %p269 = por %p267, %p268
      %p270 = scmp.ne.s32.totalorder %s259, %s262
      %p271 = scmp.eq.s32.totalorder %s34, 3
      %p272 = por %p270, %p271
      %p273 = scmp.ne.s32.totalorder %s262, %s263
      %p274 = scmp.eq.s32.totalorder %s34, 0
      %p275 = por %p273, %p274
      %p276 = scmp.ne.s32.totalorder %s262, %s263
      %p277 = scmp.eq.s32.totalorder %s35, 3
      %p278 = por %p276, %p277
      %p280 = scmp.ne.s32.totalorder %s263, %s279
      %p281 = scmp.eq.s32.totalorder %s35, 0
      %p282 = por %p280, %p281
      %s283 = ssub.s32 %s37, %s44
      %p284 = scmp.eq.s32.totalorder %s283, 0
      %s286 = sadd.s32 %s285, 1
      %s287 = scalar_select %p284, %s285, %s286
      %p290 = pneg %p284
      %p291 = scmp.eq.s32.totalorder %s29, 3
      %p292 = por %p290, %p291
      %p293 = scmp.ne.s32.totalorder %s285, %s288
      %p294 = scmp.eq.s32.totalorder %s29, 0
      %p295 = por %p293, %p294
      %p296 = scmp.ne.s32.totalorder %s285, %s288
      %p297 = scmp.eq.s32.totalorder %s34, 3
      %p298 = por %p296, %p297
      %p299 = scmp.ne.s32.totalorder %s288, %s289
      %p300 = scmp.eq.s32.totalorder %s34, 0
      %p301 = por %p299, %p300
      %p302 = scmp.ne.s32.totalorder %s288, %s289
      %p303 = scmp.eq.s32.totalorder %s35, 3
      %p304 = por %p302, %p303
      %p306 = scmp.ne.s32.totalorder %s289, %s305
      %p307 = scmp.eq.s32.totalorder %s35, 0
      %p308 = por %p306, %p307
      %s309 = ssub.s32 %s37, %s44
      %p310 = scmp.eq.s32.totalorder %s309, 0
      %s312 = sadd.s32 %s311, 1
      %s313 = scalar_select %p310, %s311, %s312
      %p316 = pneg %p310
      %p317 = scmp.eq.s32.totalorder %s29, 3
      %p318 = por %p316, %p317
      %p319 = scmp.ne.s32.totalorder %s311, %s314
      %p320 = scmp.eq.s32.totalorder %s29, 0
      %p321 = por %p319, %p320
      %p322 = scmp.ne.s32.totalorder %s311, %s314
      %p323 = scmp.eq.s32.totalorder %s34, 3
      %p324 = por %p322, %p323
      %p325 = scmp.ne.s32.totalorder %s314, %s315
      %p326 = scmp.eq.s32.totalorder %s34, 0
      %p327 = por %p325, %p326
      %p328 = scmp.ne.s32.totalorder %s314, %s315
      %p329 = scmp.eq.s32.totalorder %s35, 3
      %p330 = por %p328, %p329
      %p332 = scmp.ne.s32.totalorder %s315, %s331
      %p333 = scmp.eq.s32.totalorder %s35, 0
      %p334 = por %p332, %p333
      %s335 = ssub.s32 %s37, %s44
      %p336 = scmp.eq.s32.totalorder %s335, 0
      %s338 = sadd.s32 %s337, 1
      %s339 = scalar_select %p336, %s337, %s338
      %p342 = pneg %p336
      %p343 = scmp.eq.s32.totalorder %s29, 3
      %p344 = por %p342, %p343
      %p345 = scmp.ne.s32.totalorder %s337, %s340
      %p346 = scmp.eq.s32.totalorder %s29, 0
      %p347 = por %p345, %p346
      %p348 = scmp.ne.s32.totalorder %s337, %s340
      %p349 = scmp.eq.s32.totalorder %s34, 3
      %p350 = por %p348, %p349
      %p351 = scmp.ne.s32.totalorder %s340, %s341
      %p352 = scmp.eq.s32.totalorder %s34, 0
      %p353 = por %p351, %p352
      %p354 = scmp.ne.s32.totalorder %s340, %s341
      %p355 = scmp.eq.s32.totalorder %s35, 3
      %p356 = por %p354, %p355
      %p358 = scmp.ne.s32.totalorder %s341, %s357
      %p359 = scmp.eq.s32.totalorder %s35, 0
      %p360 = por %p358, %p359
      %s361 = ssub.s32 %s37, %s44
      %p362 = scmp.eq.s32.totalorder %s361, 0
      %s364 = sadd.s32 %s363, 1
      %s365 = scalar_select %p362, %s363, %s364
      %p368 = pneg %p362
      %p369 = scmp.eq.s32.totalorder %s29, 3
      %p370 = por %p368, %p369
      %p371 = scmp.ne.s32.totalorder %s363, %s366
      %p372 = scmp.eq.s32.totalorder %s29, 0
      %p373 = por %p371, %p372
      %p374 = scmp.ne.s32.totalorder %s363, %s366
      %p375 = scmp.eq.s32.totalorder %s34, 3
      %p376 = por %p374, %p375
      %p377 = scmp.ne.s32.totalorder %s366, %s367
      %p378 = scmp.eq.s32.totalorder %s34, 0
      %p379 = por %p377, %p378
      %p380 = scmp.ne.s32.totalorder %s366, %s367
      %p381 = scmp.eq.s32.totalorder %s35, 3
      %p382 = por %p380, %p381
      %p384 = scmp.ne.s32.totalorder %s367, %s383
      %p385 = scmp.eq.s32.totalorder %s35, 0
      %p386 = por %p384, %p385
      %s387 = ssub.s32 %s37, %s44
      %p388 = scmp.eq.s32.totalorder %s387, 0
      %s390 = sadd.s32 %s389, 1
      %s391 = scalar_select %p388, %s389, %s390
      %p394 = pneg %p388
      %p395 = scmp.eq.s32.totalorder %s29, 3
      %p396 = por %p394, %p395
      %p397 = scmp.ne.s32.totalorder %s389, %s392
      %p398 = scmp.eq.s32.totalorder %s29, 0
      %p399 = por %p397, %p398
      %p400 = scmp.ne.s32.totalorder %s389, %s392
      %p401 = scmp.eq.s32.totalorder %s34, 3
      %p402 = por %p400, %p401
      %p403 = scmp.ne.s32.totalorder %s392, %s393
      %p404 = scmp.eq.s32.totalorder %s34, 0
      %p405 = por %p403, %p404
      %p406 = scmp.ne.s32.totalorder %s392, %s393
      %p407 = scmp.eq.s32.totalorder %s35, 3
      %p408 = por %p406, %p407
      %p410 = scmp.ne.s32.totalorder %s393, %s409
      %p411 = scmp.eq.s32.totalorder %s35, 0
      %p412 = por %p410, %p411
      %s413 = ssub.s32 %s36, %s48
      %p414 = scmp.eq.s32.totalorder %s413, 0
      %s416 = sadd.s32 %s415, 1
      %s417 = scalar_select %p414, %s415, %s416
      %p420 = pneg %p414
      %p421 = scmp.eq.s32.totalorder %s29, 3
      %p422 = por %p420, %p421
      %p423 = scmp.ne.s32.totalorder %s415, %s418
      %p424 = scmp.eq.s32.totalorder %s29, 0
      %p425 = por %p423, %p424
      %p426 = scmp.ne.s32.totalorder %s415, %s418
      %p427 = scmp.eq.s32.totalorder %s34, 3
      %p428 = por %p426, %p427
      %p429 = scmp.ne.s32.totalorder %s418, %s419
      %p430 = scmp.eq.s32.totalorder %s34, 0
      %p431 = por %p429, %p430
      %p432 = scmp.ne.s32.totalorder %s418, %s419
      %p433 = scmp.eq.s32.totalorder %s35, 3
      %p434 = por %p432, %p433
      %p436 = scmp.ne.s32.totalorder %s419, %s435
      %p437 = scmp.eq.s32.totalorder %s35, 0
      %p438 = por %p436, %p437
      %p439 = scmp.le.s32.totalorder 1, %s29
      %p440 = scmp.lt.s32.totalorder %s29, 5
      %p441 = pnand %p439, %p440
      %p442 = pneg %p441
      // Predicated region
      $region9: #{tpu_custom_call.1} parent=5 // pred_check
        _
      $region10: #{tpu_custom_call.1} parent=5 // pred_check_branch
        %444 = sbr.rel (%p441) target = $region12
      $region11: #{tpu_custom_call.1} parent=5 // pred_region
        %s445 = ssub.s32 %s29, 1
      $region12: #{tpu_custom_call.1} parent=5 // pred_fallthru
        _
      %p446 = scmp.lt.s32.totalorder %s29, 4
      // Predicated region
      $region13: #{tpu_custom_call.1} parent=5 // pred_check
        %p447 = pneg %p446
      $region14: #{tpu_custom_call.1} parent=5 // pred_check_branch
        %449 = sbr.rel (%p447) target = $region16
      $region15: #{tpu_custom_call.1} parent=5 // pred_region
        // Predicated region
        $region17: #{tpu_custom_call.1} parent=15 // pred_check
          %p450 = pneg %p61
        $region18: #{tpu_custom_call.1} parent=15 // pred_check_branch
          %452 = sbr.rel (%p450) target = $region20
        $region19: #{tpu_custom_call.1} parent=15 // pred_region
          %s453 = sand.u32 %s51, 1
          %s454 = scalar_lea.sflag [#allocation3], %s453
          %s455 = sand.u32 %s51, 1
          %s456 = smul.addr %s455, 16
          %s457 = scalar_lea.vmem [#allocation2], %s456
          %s459 = ssub.s32 256, 256
          %460 = vsyncadd %s454, %s459
          %s461 = smul.addr %s36, 2
          %s462 = smul.addr %s461, 128
          %s463 = scalar_lea.hbm %s0, %s462
          %s464 = sshll.u32 %s457, 4
          %s465 = int_to_ptr.vmem [resolvable:$true] %s464
          %470 = dma.hbm_to_vmem [thread:$0]  %s463, 256, %s465, %s454, 128, 128, 8
        $region20: #{tpu_custom_call.1} parent=15 // pred_fallthru
          _
        // Predicated region
        $region21: #{tpu_custom_call.1} parent=15 // pred_check
          %p471 = pneg %p87
        $region22: #{tpu_custom_call.1} parent=15 // pred_check_branch
          %473 = sbr.rel (%p471) target = $region24
        $region23: #{tpu_custom_call.1} parent=15 // pred_region
          %p474 = scmp.lt.s32.totalorder %s36, 1
          %s475 = scalar_select %p474, %s36, 1
          %s476 = scalar_lea.vmem %s1, %s475
        $region24: #{tpu_custom_call.1} parent=15 // pred_fallthru
          _
        // Predicated region
        $region25: #{tpu_custom_call.1} parent=15 // pred_check
          %p477 = pneg %p113
        $region26: #{tpu_custom_call.1} parent=15 // pred_check_branch
          %479 = sbr.rel (%p477) target = $region28
        $region27: #{tpu_custom_call.1} parent=15 // pred_region
          %p480 = scmp.lt.s32.totalorder %s37, 1
          %s481 = scalar_select %p480, %s37, 1
          %s482 = smul.addr %s481, 16
          %s483 = smul.addr %s482, 4
          %s484 = scalar_lea.vmem %s2, %s483
        $region28: #{tpu_custom_call.1} parent=15 // pred_fallthru
          _
        // Predicated region
        $region29: #{tpu_custom_call.1} parent=15 // pred_check
          %p485 = pneg %p139
        $region30: #{tpu_custom_call.1} parent=15 // pred_check_branch
          %487 = sbr.rel (%p485) target = $region32
        $region31: #{tpu_custom_call.1} parent=15 // pred_region
          %s488 = sand.u32 %s29, 1
          %s489 = scalar_lea.sflag [#allocation6], %s488
          %s490 = sand.u32 %s129, 1
          %s491 = smul.addr %s490, 2
          %s492 = scalar_lea.vmem [#allocation5], %s491
          %s494 = ssub.s32 32, 32
          %495 = vsyncadd %s489, %s494
          %s496 = smul.addr %s37, 2
          %s497 = smul.addr %s496, 16
          %s498 = scalar_lea.hbm %s3, %s497
          %s500 = sshll.u32 %s492, 4
          %s501 = int_to_ptr.vmem [resolvable:$true] %s500
          %503 = dma.hbm_to_vmem [thread:$0]  %s498, 32, %s501, %s489
        $region32: #{tpu_custom_call.1} parent=15 // pred_fallthru
          _
        // Predicated region
        $region33: #{tpu_custom_call.1} parent=15 // pred_check
          %p504 = pneg %p165
        $region34: #{tpu_custom_call.1} parent=15 // pred_check_branch
          %506 = sbr.rel (%p504) target = $region36
        $region35: #{tpu_custom_call.1} parent=15 // pred_region
          %p507 = scmp.lt.s32.totalorder %s37, 1
          %s508 = scalar_select %p507, %s37, 1
          %s509 = smul.addr %s508, 8
          %s510 = smul.addr %s509, 4
          %s511 = scalar_lea.vmem %s4, %s510
        $region36: #{tpu_custom_call.1} parent=15 // pred_fallthru
          _
        // Predicated region
        $region37: #{tpu_custom_call.1} parent=15 // pred_check
          %p512 = pneg %p191
        $region38: #{tpu_custom_call.1} parent=15 // pred_check_branch
          %514 = sbr.rel (%p512) target = $region40
        $region39: #{tpu_custom_call.1} parent=15 // pred_region
          %p515 = scmp.lt.s32.totalorder %s37, 1
          %s516 = scalar_select %p515, %s37, 1
          %s517 = scalar_lea.vmem %s5, %s516
        $region40: #{tpu_custom_call.1} parent=15 // pred_fallthru
          _
        // Predicated region
        $region41: #{tpu_custom_call.1} parent=15 // pred_check
          %p518 = pneg %p217
        $region42: #{tpu_custom_call.1} parent=15 // pred_check_branch
          %520 = sbr.rel (%p518) target = $region44
        $region43: #{tpu_custom_call.1} parent=15 // pred_region
          %p521 = scmp.lt.s32.totalorder %s37, 1
          %s522 = scalar_select %p521, %s37, 1
          %s523 = scalar_lea.vmem %s6, %s522
        $region44: #{tpu_custom_call.1} parent=15 // pred_fallthru
          _
        // Predicated region
        $region45: #{tpu_custom_call.1} parent=15 // pred_check
          %p524 = pneg %p243
        $region46: #{tpu_custom_call.1} parent=15 // pred_check_branch
          %526 = sbr.rel (%p524) target = $region48
        $region47: #{tpu_custom_call.1} parent=15 // pred_region
          %p527 = scmp.lt.s32.totalorder %s37, 1
          %s528 = scalar_select %p527, %s37, 1
          %s529 = scalar_lea.vmem %s7, %s528
        $region48: #{tpu_custom_call.1} parent=15 // pred_fallthru
          _
        // Predicated region
        $region49: #{tpu_custom_call.1} parent=15 // pred_check
          %p530 = pneg %p269
        $region50: #{tpu_custom_call.1} parent=15 // pred_check_branch
          %532 = sbr.rel (%p530) target = $region52
        $region51: #{tpu_custom_call.1} parent=15 // pred_region
          %s533 = sand.u32 %s29, 1
          %s534 = scalar_lea.sflag [#allocation6], %s533
          %s535 = sand.u32 %s259, 1
          %s536 = smul.addr %s535, 32
          %s537 = scalar_lea.vmem [#allocation7], %s536
          %s539 = ssub.s32 512, 512
          %540 = vsyncadd %s534, %s539
          %s541 = smul.addr %s37, 8
          %s542 = smul.addr %s541, 64
          %s543 = scalar_lea.hbm %s8, %s542
          %s544 = sshll.u32 %s537, 4
          %s545 = int_to_ptr.vmem [resolvable:$true] %s544
          %550 = dma.hbm_to_vmem [thread:$0]  %s543, 512, %s545, %s534, 64, 64, 4
        $region52: #{tpu_custom_call.1} parent=15 // pred_fallthru
          _
        // Predicated region
        $region53: #{tpu_custom_call.1} parent=15 // pred_check
          %p551 = pneg %p295
        $region54: #{tpu_custom_call.1} parent=15 // pred_check_branch
          %553 = sbr.rel (%p551) target = $region56
        $region55: #{tpu_custom_call.1} parent=15 // pred_region
          %p554 = scmp.lt.s32.totalorder %s37, 1
          %s555 = scalar_select %p554, %s37, 1
          %s556 = scalar_lea.vmem %s9, %s555
        $region56: #{tpu_custom_call.1} parent=15 // pred_fallthru
          _
        // Predicated region
        $region57: #{tpu_custom_call.1} parent=15 // pred_check
          %p557 = pneg %p321
        $region58: #{tpu_custom_call.1} parent=15 // pred_check_branch
          %559 = sbr.rel (%p557) target = $region60
        $region59: #{tpu_custom_call.1} parent=15 // pred_region
          %p560 = scmp.lt.s32.totalorder %s37, 1
          %s561 = scalar_select %p560, %s37, 1
          %s562 = smul.addr %s561, 16
          %s563 = smul.addr %s562, 4
          %s564 = scalar_lea.vmem %s10, %s563
        $region60: #{tpu_custom_call.1} parent=15 // pred_fallthru
          _
        // Predicated region
        $region61: #{tpu_custom_call.1} parent=15 // pred_check
          %p565 = pneg %p347
        $region62: #{tpu_custom_call.1} parent=15 // pred_check_branch
          %567 = sbr.rel (%p565) target = $region64
        $region63: #{tpu_custom_call.1} parent=15 // pred_region
          %p568 = scmp.lt.s32.totalorder %s37, 1
          %s569 = scalar_select %p568, %s37, 1
          %s570 = scalar_lea.vmem %s11, %s569
        $region64: #{tpu_custom_call.1} parent=15 // pred_fallthru
          _
        // Predicated region
        $region65: #{tpu_custom_call.1} parent=15 // pred_check
          %p571 = pneg %p373
        $region66: #{tpu_custom_call.1} parent=15 // pred_check_branch
          %573 = sbr.rel (%p571) target = $region68
        $region67: #{tpu_custom_call.1} parent=15 // pred_region
          %p574 = scmp.lt.s32.totalorder %s37, 1
          %s575 = scalar_select %p574, %s37, 1
          %s576 = scalar_lea.vmem %s12, %s575
        $region68: #{tpu_custom_call.1} parent=15 // pred_fallthru
          _
        // Predicated region
        $region69: #{tpu_custom_call.1} parent=15 // pred_check
          %p577 = pneg %p399
        $region70: #{tpu_custom_call.1} parent=15 // pred_check_branch
          %579 = sbr.rel (%p577) target = $region72
        $region71: #{tpu_custom_call.1} parent=15 // pred_region
          %p580 = scmp.lt.s32.totalorder %s37, 1
          %s581 = scalar_select %p580, %s37, 1
          %s582 = scalar_lea.vmem %s13, %s581
        $region72: #{tpu_custom_call.1} parent=15 // pred_fallthru
          _
      $region16: #{tpu_custom_call.1} parent=5 // pred_fallthru
        _
      %p583 = scmp.le.s32.totalorder 1, %s29
      %p584 = scmp.lt.s32.totalorder %s29, 5
      %p585 = pnand %p583, %p584
      %p586 = pneg %p585
      // Predicated region
      $region73: #{tpu_custom_call.1} parent=5 // pred_check
        _
      $region74: #{tpu_custom_call.1} parent=5 // pred_check_branch
        %588 = sbr.rel (%p585) target = $region76
      $region75: #{tpu_custom_call.1} parent=5 // pred_region
        %s589 = ssub.s32 %s29, 1
        %s590 = sand.u32 %s54, 1
        %s591 = scalar_lea.sflag [#allocation3], %s590
        %s592 = sand.u32 %s54, 1
        %s593 = smul.addr %s592, 16
        %s594 = scalar_lea.vmem [#allocation2], %s593
        // Predicated region
        $region77: #{tpu_custom_call.1} parent=75 // pred_check
          %p595 = pneg %p67
        $region78: #{tpu_custom_call.1} parent=75 // pred_check_branch
          %597 = sbr.rel (%p595) target = $region80
        $region79: #{tpu_custom_call.1} parent=75 // pred_region
          %598 = dma.done %s591, 256
        $region80: #{tpu_custom_call.1} parent=75 // pred_fallthru
          _
        %s599 = sand.u32 %s34, 1
        %s600 = scalar_lea.sflag [#allocation6], %s599
        %s601 = sand.u32 %s132, 1
        %s602 = smul.addr %s601, 2
        %s603 = scalar_lea.vmem [#allocation5], %s602
        // Predicated region
        $region81: #{tpu_custom_call.1} parent=75 // pred_check
          %p604 = pneg %p145
        $region82: #{tpu_custom_call.1} parent=75 // pred_check_branch
          %606 = sbr.rel (%p604) target = $region84
        $region83: #{tpu_custom_call.1} parent=75 // pred_region
          %607 = dma.done %s600, 32
        $region84: #{tpu_custom_call.1} parent=75 // pred_fallthru
          _
        %s608 = sand.u32 %s34, 1
        %s609 = scalar_lea.sflag [#allocation6], %s608
        %s610 = sand.u32 %s262, 1
        %s611 = smul.addr %s610, 32
        %s612 = scalar_lea.vmem [#allocation7], %s611
        // Predicated region
        $region85: #{tpu_custom_call.1} parent=75 // pred_check
          %p613 = pneg %p275
        $region86: #{tpu_custom_call.1} parent=75 // pred_check_branch
          %615 = sbr.rel (%p613) target = $region88
        $region87: #{tpu_custom_call.1} parent=75 // pred_region
          %616 = dma.done %s609, 512
        $region88: #{tpu_custom_call.1} parent=75 // pred_fallthru
          _
        %s617 = sand.u32 %s54, 1
        %s618 = scalar_lea.sflag [#allocation3], %s617
        %s619 = sand.u32 %s54, 1
        %s620 = smul.addr %s619, 16
        %s621 = scalar_lea.vmem [#allocation2], %s620
        %p622 = pneg %p67
        %p623 = pneg %p64
        %p624 = scmp.lt.s32.totalorder %s38, 1
        %s625 = scalar_select %p624, %s38, 1
        %s626 = scalar_lea.vmem %s1, %s625
        %p627 = pneg %p93
        %p628 = pneg %p90
        %p629 = scmp.lt.s32.totalorder %s39, 1
        %s630 = scalar_select %p629, %s39, 1
        %s631 = smul.addr %s630, 16
        %s632 = smul.addr %s631, 4
        %s633 = scalar_lea.vmem %s2, %s632
        %p634 = pneg %p119
        %p635 = pneg %p116
        %s636 = sand.u32 %s34, 1
        %s637 = scalar_lea.sflag [#allocation6], %s636
        %s638 = sand.u32 %s132, 1
        %s639 = smul.addr %s638, 2
        %s640 = scalar_lea.vmem [#allocation5], %s639
        %p641 = pneg %p145
        %p642 = pneg %p142
        %p643 = scmp.lt.s32.totalorder %s39, 1
        %s644 = scalar_select %p643, %s39, 1
        %s645 = smul.addr %s644, 8
        %s646 = smul.addr %s645, 4
        %s647 = scalar_lea.vmem %s4, %s646
        %p648 = pneg %p171
        %p649 = pneg %p168
        %p650 = scmp.lt.s32.totalorder %s39, 1
        %s651 = scalar_select %p650, %s39, 1
        %s652 = scalar_lea.vmem %s5, %s651
        %p653 = pneg %p197
        %p654 = pneg %p194
        %p655 = scmp.lt.s32.totalorder %s39, 1
        %s656 = scalar_select %p655, %s39, 1
        %s657 = scalar_lea.vmem %s6, %s656
        %p658 = pneg %p223
        %p659 = pneg %p220
        %p660 = scmp.lt.s32.totalorder %s39, 1
        %s661 = scalar_select %p660, %s39, 1
        %s662 = scalar_lea.vmem %s7, %s661
        %p663 = pneg %p249
        %p664 = pneg %p246
        %s665 = sand.u32 %s34, 1
        %s666 = scalar_lea.sflag [#allocation6], %s665
        %s667 = sand.u32 %s262, 1
        %s668 = smul.addr %s667, 32
        %s669 = scalar_lea.vmem [#allocation7], %s668
        %p670 = pneg %p275
        %p671 = pneg %p272
        %p672 = scmp.lt.s32.totalorder %s39, 1
        %s673 = scalar_select %p672, %s39, 1
        %s674 = scalar_lea.vmem %s9, %s673
        %p675 = pneg %p301
        %p676 = pneg %p298
        %p677 = scmp.lt.s32.totalorder %s39, 1
        %s678 = scalar_select %p677, %s39, 1
        %s679 = smul.addr %s678, 16
        %s680 = smul.addr %s679, 4
        %s681 = scalar_lea.vmem %s10, %s680
        %p682 = pneg %p327
        %p683 = pneg %p324
        %p684 = scmp.lt.s32.totalorder %s39, 1
        %s685 = scalar_select %p684, %s39, 1
        %s686 = scalar_lea.vmem %s11, %s685
        %p687 = pneg %p353
        %p688 = pneg %p350
        %p689 = scmp.lt.s32.totalorder %s39, 1
        %s690 = scalar_select %p689, %s39, 1
        %s691 = scalar_lea.vmem %s12, %s690
        %p692 = pneg %p379
        %p693 = pneg %p376
        %p694 = scmp.lt.s32.totalorder %s39, 1
        %s695 = scalar_select %p694, %s39, 1
        %s696 = scalar_lea.vmem %s13, %s695
        %p697 = pneg %p405
        %p698 = pneg %p402
        %p699 = pneg %p431
        %p700 = pneg %p428
        %s701 = sand.u32 %s418, 1
        %s702 = scalar_lea.sflag [#allocation4], %s701
        %s703 = sand.u32 %s418, 1
        %s704 = smul.addr %s703, 16
        %s705 = scalar_lea.vmem [#allocation8], %s704
        %p706 = scmp.lt.s32.totalorder %s38, 1
        %s707 = scalar_select %p706, %s38, 1
        %s708 = scalar_lea.vmem %s1, %s707
        %p709 = scmp.lt.s32.totalorder %s39, 1
        %s710 = scalar_select %p709, %s39, 1
        %s711 = smul.addr %s710, 16
        %s712 = smul.addr %s711, 4
        %s713 = scalar_lea.vmem %s2, %s712
        %p714 = scmp.lt.s32.totalorder %s39, 1
        %s715 = scalar_select %p714, %s39, 1
        %s716 = smul.addr %s715, 8
        %s717 = smul.addr %s716, 4
        %s718 = scalar_lea.vmem %s4, %s717
        %p719 = scmp.lt.s32.totalorder %s39, 1
        %s720 = scalar_select %p719, %s39, 1
        %s721 = scalar_lea.vmem %s5, %s720
        %p722 = scmp.lt.s32.totalorder %s39, 1
        %s723 = scalar_select %p722, %s39, 1
        %s724 = scalar_lea.vmem %s6, %s723
        %p725 = scmp.lt.s32.totalorder %s39, 1
        %s726 = scalar_select %p725, %s39, 1
        %s727 = scalar_lea.vmem %s7, %s726
        %p728 = scmp.lt.s32.totalorder %s39, 1
        %s729 = scalar_select %p728, %s39, 1
        %s730 = scalar_lea.vmem %s9, %s729
        %p731 = scmp.lt.s32.totalorder %s39, 1
        %s732 = scalar_select %p731, %s39, 1
        %s733 = smul.addr %s732, 16
        %s734 = smul.addr %s733, 4
        %s735 = scalar_lea.vmem %s10, %s734
        %p736 = scmp.lt.s32.totalorder %s39, 1
        %s737 = scalar_select %p736, %s39, 1
        %s738 = scalar_lea.vmem %s11, %s737
        %p739 = scmp.lt.s32.totalorder %s39, 1
        %s740 = scalar_select %p739, %s39, 1
        %s741 = scalar_lea.vmem %s12, %s740
        %p742 = scmp.lt.s32.totalorder %s39, 1
        %s743 = scalar_select %p742, %s39, 1
        %s744 = scalar_lea.vmem %s13, %s743
        %p746 = scmp.eq.s32.totalorder %s39, 0
        // Predicated region
        $region89: #{tpu_custom_call.1} parent=75 // pred_check
          %p747 = pneg %p746
        $region90: #{tpu_custom_call.1} parent=75 // pred_check_branch
          %749 = sbr.rel (%p747) target = $region92
        $region91: #{tpu_custom_call.1} parent=75 // pred_region
          %v750 = vld [vmem:[%s594] sm:$0xff]
          %v751 = vld [vmem:[%s594 + $0x8] sm:$0xff]
          %vm752 = vcmask 523264
          %753 = vst.msk [vmem:[%s705] sm:$0xff] %vm752, %v750
          %754 = vst.msk [vmem:[%s705 + $0x8] sm:$0xff] %vm752, %v751
        $region92: #{tpu_custom_call.1} parent=75 // pred_fallthru
          _
        %v755 = vld [vmem:[%s705] sm:$0xff]
        %v756 = vld [vmem:[%s705 + $0x8] sm:$0xff]
        %v757 = vld [vmem:[%s708] sm:$0x1]
        %v758 = vpack.c.bf16 %v756, %v755
        %v759 = vld [vmem:[%s713] sm:$0xff]
        %v760 = vld [vmem:[%s713 + $0x8] sm:$0xff]
        %v761 = vld [vmem:[%s713 + $0x10] sm:$0xff]
        %v762 = vld [vmem:[%s713 + $0x18] sm:$0xff]
        %v763 = vld [vmem:[%s713 + $0x20] sm:$0xff]
        %v764 = vld [vmem:[%s713 + $0x28] sm:$0xff]
        %v765 = vld [vmem:[%s713 + $0x30] sm:$0xff]
        %v766 = vld [vmem:[%s713 + $0x38] sm:$0xff]
        %v767 = vld [vmem:[%s603] sm:$0x3]
        %v769 = vlaneseq
        %v770 = vshrl.u32 %v769, 7
        %v771 = vsub.s32 0, %v770
        %v772 = vrot.slane %v767, %v771
        %v773 = vlaneseq
        %v774 = vshrl.u32 %v773, 7
        %v775 = vsub.s32 1, %v774
        %v776 = vrot.slane %v767, %v775
        %v787 = vunpack.c.l.b16 %v759
        %v788 = vunpack.c.h.b16 %v759
        %v789 = vunpack.c.l.b16 %v760
        %v790 = vunpack.c.h.b16 %v760
        %v791 = vunpack.c.l.b16 %v761
        %v792 = vunpack.c.h.b16 %v761
        %v793 = vunpack.c.l.b16 %v762
        %v794 = vunpack.c.h.b16 %v762
        %v795 = vunpack.c.l.b16 %v763
        %v796 = vunpack.c.h.b16 %v763
        %v797 = vunpack.c.l.b16 %v764
        %v798 = vunpack.c.h.b16 %v764
        %v799 = vunpack.c.l.b16 %v765
        %v800 = vunpack.c.h.b16 %v765
        %v801 = vunpack.c.l.b16 %v766
        %v802 = vunpack.c.h.b16 %v766
        %v803 = vpack.c.b16 %v789, %v787
        %v804 = vpack.c.b16 %v790, %v788
        %v805 = vpack.c.b16 %v793, %v791
        %v806 = vpack.c.b16 %v794, %v792
        %v807 = vpack.c.b16 %v797, %v795
        %v808 = vpack.c.b16 %v798, %v796
        %v809 = vpack.c.b16 %v801, %v799
        %v810 = vpack.c.b16 %v802, %v800
        %vm819 = vcmask 523264
        %v821 = vsel %vm819, %v758, 0
        %823 = vmatprep.subr.bf16.mxu0 0
        %824 = vmatpush1.bf16.msra.mxu0 0
        %825 = vmatprep.subr.bf16.mxu0 0
        %826 = vmatpush1.bf16.msra.mxu0 0
        %827 = vmatprep.subr.bf16.mxu0 0
        %828 = vmatpush1.bf16.msra.mxu0 0
        %829 = vmatprep.subr.bf16.mxu0 0
        %830 = vmatpush1.bf16.msra.mxu0 0
        %831 = vmatprep.subr.bf16.mxu0 %v810
        %832 = vmatpush1.bf16.msra.mxu0 %v809
        %833 = vmatprep.subr.bf16.mxu0 %v808
        %834 = vmatpush1.bf16.msra.mxu0 %v807
        %835 = vmatprep.subr.bf16.mxu0 %v806
        %836 = vmatpush1.bf16.msra.mxu0 %v805
        %837 = vmatprep.subr.bf16.mxu0 %v804
        %838 = vmatpush1.bf16.msra.mxu0 %v803
        %839 = vmatprep.subr.bf16.mxu0 0
        %840 = vmatpush2.bf16.msra.mxu0 0
        %841 = vmatprep.subr.bf16.mxu0 0
        %842 = vmatpush2.bf16.msra.mxu0 0
        %843 = vmatprep.subr.bf16.mxu0 0
        %844 = vmatpush2.bf16.msra.mxu0 0
        %845 = vmatprep.subr.bf16.mxu0 0
        %846 = vmatpush2.bf16.msra.mxu0 0
        %847 = vmatprep.subr.bf16.mxu0 0
        %848 = vmatpush2.bf16.msra.mxu0 0
        %849 = vmatprep.subr.bf16.mxu0 0
        %850 = vmatpush2.bf16.msra.mxu0 0
        %851 = vmatprep.subr.bf16.mxu0 0
        %852 = vmatpush2.bf16.msra.mxu0 0
        %853 = vmatprep.subr.bf16.mxu0 0
        %854 = vmatpush2.bf16.msra.mxu0 0
        %855 = vmatprep.mubr.bf16.mxu0 0
        %856 = vmatmul.mubr.bf16.gmra.mxu0 %v821
        %v857 = vpop.f32.mrf.mxu0
        %v858 = vadd.f32 %v772, %v857
        %v859 = vpop.f32.mrf.mxu0
        %v860 = vadd.f32 %v776, %v859
        %v861 = vpop.f32.mrf.mxu0
        %v862 = vadd.f32 %v772, %v861
        %v863 = vpop.f32.mrf.mxu0
        %v864 = vadd.f32 %v776, %v863
        %865 = vdwg.mxu0
        %v866 = vpack.c.bf16 %v862, %v858
        %v867 = vpack.c.bf16 %v864, %v860
        %v869 = vlaneseq
        %v870 = vshrl.u32 %v869, 7
        %v871 = vsub.s32 0, %v870
        %v872 = vrot.slane %v757, %v871
        %875 = vrot.lane.b32.xlu0 %v866, 64
        %v876 = vpop.permute.xlu0 %875
        %vm877 = vcmask 130048
        %v879 = vsel %vm877, %v866, 0
        %v882 = vsel %vm877, %v876, 0
        %884 = vmatprep.subr.bf16.mxu0 0
        %885 = vmatpush1.bf16.xpose.msra.mxu0 0
        %886 = vmatprep.subr.bf16.mxu0 0
        %887 = vmatpush1.bf16.xpose.msra.mxu0 0
        %888 = vmatprep.subr.bf16.mxu0 0
        %889 = vmatpush1.bf16.xpose.msra.mxu0 0
        %890 = vmatprep.subr.bf16.mxu0 0
        %891 = vmatpush1.bf16.xpose.msra.mxu0 0
        %892 = vmatprep.subr.bf16.mxu0 0
        %893 = vmatpush1.bf16.xpose.msra.mxu0 0
        %894 = vmatprep.subr.bf16.mxu0 0
        %895 = vmatpush1.bf16.xpose.msra.mxu0 0
        %896 = vmatprep.subr.bf16.mxu0 0
        %897 = vmatpush1.bf16.xpose.msra.mxu0 0
        %898 = vmatprep.subr.bf16.mxu0 0
        %899 = vmatpush1.bf16.xpose.msra.mxu0 %v882
        %900 = vmatprep.subr.bf16.mxu0 0
        %901 = vmatpush2.bf16.xpose.msra.mxu0 0
        %902 = vmatprep.subr.bf16.mxu0 0
        %903 = vmatpush2.bf16.xpose.msra.mxu0 0
        %904 = vmatprep.subr.bf16.mxu0 0
        %905 = vmatpush2.bf16.xpose.msra.mxu0 0
        %906 = vmatprep.subr.bf16.mxu0 0
        %907 = vmatpush2.bf16.xpose.msra.mxu0 0
        %908 = vmatprep.subr.bf16.mxu0 0
        %909 = vmatpush2.bf16.xpose.msra.mxu0 0
        %910 = vmatprep.subr.bf16.mxu0 0
        %911 = vmatpush2.bf16.xpose.msra.mxu0 0
        %912 = vmatprep.subr.bf16.mxu0 0
        %913 = vmatpush2.bf16.xpose.msra.mxu0 0
        %914 = vmatprep.subr.bf16.mxu0 0
        %915 = vmatpush2.bf16.xpose.msra.mxu0 0
        %916 = vmatprep.mubr.bf16.mxu0 0
        %917 = vmatmul.mubr.bf16.gmra.mxu0 %v879
        %v918 = vpop.f32.mrf.mxu0
        %v919 = vadd.f32 %v872, %v918
        %v920 = vpop.f32.mrf.mxu0
        %v921 = vpop.f32.mrf.mxu0
        %v922 = vadd.f32 %v872, %v921
        %v923 = vpop.f32.mrf.mxu0
        %924 = vdwg.mxu0
        %v925 = vsel %vm877, %v919, -inf
        %926 = vmax.xlane.f32.xlu0 %v925
        %v927 = vpop.xlane.xlu0 %926
        %v928 = vsel %vm877, %v922, -inf
        %929 = vmax.xlane.f32.xlu0 %v928
        %v930 = vpop.xlane.xlu0 %929
        %v931 = vsub.f32 %v919, %v927
        %v932 = vsub.f32 %v922, %v930
        %v933 = vmul.f32 %v931, 1.442695
        %v934 = vpow.pop %v933
        %v935 = vmul.f32 %v932, 1.442695
        %v936 = vpow.pop %v935
        %v937 = vsel %vm877, %v934, 0.0
        %938 = vadd.xlane.f32.xlu0 %v937
        %v939 = vpop.xlane.xlu0 %938
        %v940 = vsel %vm877, %v936, 0.0
        %941 = vadd.xlane.f32.xlu0 %v940
        %v942 = vpop.xlane.xlu0 %941
        %v943 = vrcp.pop %v939
        %v944 = vrcp.pop %v942
        %v945 = vmul.f32 %v934, %v943
        %v946 = vmul.f32 %v936, %v944
        %v947 = vpack.c.bf16 %v946, %v945
        %v949 = vsel %vm877, %v947, 0
        %951 = vmatprep.subr.bf16.mxu0 0
        %952 = vmatpush1.bf16.msra.mxu0 0
        %953 = vmatprep.subr.bf16.mxu0 0
        %954 = vmatpush1.bf16.msra.mxu0 0
        %955 = vmatprep.subr.bf16.mxu0 0
        %956 = vmatpush1.bf16.msra.mxu0 0
        %957 = vmatprep.subr.bf16.mxu0 0
        %958 = vmatpush1.bf16.msra.mxu0 0
        %959 = vmatprep.subr.bf16.mxu0 0
        %960 = vmatpush1.bf16.msra.mxu0 0
        %961 = vmatprep.subr.bf16.mxu0 0
        %962 = vmatpush1.bf16.msra.mxu0 0
        %963 = vmatprep.subr.bf16.mxu0 0
        %964 = vmatpush1.bf16.msra.mxu0 0
        %965 = vmatprep.subr.bf16.mxu0 0
        %966 = vmatpush1.bf16.msra.mxu0 %v867
        %967 = vmatprep.subr.bf16.mxu0 0
        %968 = vmatpush2.bf16.msra.mxu0 0
        %969 = vmatprep.subr.bf16.mxu0 0
        %970 = vmatpush2.bf16.msra.mxu0 0
        %971 = vmatprep.subr.bf16.mxu0 0
        %972 = vmatpush2.bf16.msra.mxu0 0
        %973 = vmatprep.subr.bf16.mxu0 0
        %974 = vmatpush2.bf16.msra.mxu0 0
        %975 = vmatprep.subr.bf16.mxu0 0
        %976 = vmatpush2.bf16.msra.mxu0 0
        %977 = vmatprep.subr.bf16.mxu0 0
        %978 = vmatpush2.bf16.msra.mxu0 0
        %979 = vmatprep.subr.bf16.mxu0 0
        %980 = vmatpush2.bf16.msra.mxu0 0
        %981 = vmatprep.subr.bf16.mxu0 0
        %982 = vmatpush2.bf16.msra.mxu0 0
        %983 = vmatprep.mubr.bf16.mxu0 0
        %984 = vmatmul.mubr.bf16.gmra.mxu0 %v949
        %v985 = vpop.f32.mrf.mxu0
        %v986 = vadd.f32 0.0, %v985
        %v987 = vpop.f32.mrf.mxu0
        %v988 = vpop.f32.mrf.mxu0
        %v989 = vadd.f32 0.0, %v988
        %v990 = vpop.f32.mrf.mxu0
        %991 = vdwg.mxu0
        %992 = vrot.lane.b32.xlu0 %v866, 112
        %v993 = vpop.permute.xlu0 %992
        %994 = vrot.lane.b32.xlu0 %v866, 48
        %v995 = vpop.permute.xlu0 %994
        %v997 = vsel %vm877, %v993, 0
        %v1000 = vsel %vm877, %v995, 0
        %1002 = vmatprep.subr.bf16.mxu0 0
        %1003 = vmatpush1.bf16.xpose.msra.mxu0 0
        %1004 = vmatprep.subr.bf16.mxu0 0
        %1005 = vmatpush1.bf16.xpose.msra.mxu0 0
        %1006 = vmatprep.subr.bf16.mxu0 0
        %1007 = vmatpush1.bf16.xpose.msra.mxu0 0
        %1008 = vmatprep.subr.bf16.mxu0 0
        %1009 = vmatpush1.bf16.xpose.msra.mxu0 0
        %1010 = vmatprep.subr.bf16.mxu0 0
        %1011 = vmatpush1.bf16.xpose.msra.mxu0 0
        %1012 = vmatprep.subr.bf16.mxu0 0
        %1013 = vmatpush1.bf16.xpose.msra.mxu0 0
        %1014 = vmatprep.subr.bf16.mxu0 0
        %1015 = vmatpush1.bf16.xpose.msra.mxu0 0
        %1016 = vmatprep.subr.bf16.mxu0 0
        %1017 = vmatpush1.bf16.xpose.msra.mxu0 %v1000
        %1018 = vmatprep.subr.bf16.mxu0 0
        %1019 = vmatpush2.bf16.xpose.msra.mxu0 0
        %1020 = vmatprep.subr.bf16.mxu0 0
        %1021 = vmatpush2.bf16.xpose.msra.mxu0 0
        %1022 = vmatprep.subr.bf16.mxu0 0
        %1023 = vmatpush2.bf16.xpose.msra.mxu0 0
        %1024 = vmatprep.subr.bf16.mxu0 0
        %1025 = vmatpush2.bf16.xpose.msra.mxu0 0
        %1026 = vmatprep.subr.bf16.mxu0 0
        %1027 = vmatpush2.bf16.xpose.msra.mxu0 0
        %1028 = vmatprep.subr.bf16.mxu0 0
        %1029 = vmatpush2.bf16.xpose.msra.mxu0 0
        %1030 = vmatprep.subr.bf16.mxu0 0
        %1031 = vmatpush2.bf16.xpose.msra.mxu0 0
        %1032 = vmatprep.subr.bf16.mxu0 0
        %1033 = vmatpush2.bf16.xpose.msra.mxu0 0
        %1034 = vmatprep.mubr.bf16.mxu0 0
        %1035 = vmatmul.mubr.bf16.gmra.mxu0 %v997
        %v1036 = vpop.f32.mrf.mxu0
        %v1037 = vadd.f32 %v872, %v1036
        %v1038 = vpop.f32.mrf.mxu0
        %v1039 = vpop.f32.mrf.mxu0
        %v1040 = vadd.f32 %v872, %v1039
        %v1041 = vpop.f32.mrf.mxu0
        %1042 = vdwg.mxu0
        %v1043 = vsel %vm877, %v1037, -inf
        %1044 = vmax.xlane.f32.xlu0 %v1043
        %v1045 = vpop.xlane.xlu0 %1044
        %v1046 = vsel %vm877, %v1040, -inf
        %1047 = vmax.xlane.f32.xlu0 %v1046
        %v1048 = vpop.xlane.xlu0 %1047
        %v1049 = vsub.f32 %v1037, %v1045
        %v1050 = vsub.f32 %v1040, %v1048
        %v1051 = vmul.f32 %v1049, 1.442695
        %v1052 = vpow.pop %v1051
        %v1053 = vmul.f32 %v1050, 1.442695
        %v1054 = vpow.pop %v1053
        %v1055 = vsel %vm877, %v1052, 0.0
        %1056 = vadd.xlane.f32.xlu0 %v1055
        %v1057 = vpop.xlane.xlu0 %1056
        %v1058 = vsel %vm877, %v1054, 0.0
        %1059 = vadd.xlane.f32.xlu0 %v1058
        %v1060 = vpop.xlane.xlu0 %1059
        %v1061 = vrcp.pop %v1057
        %v1062 = vrcp.pop %v1060
        %v1063 = vmul.f32 %v1052, %v1061
        %v1064 = vmul.f32 %v1054, %v1062
        %v1065 = vpack.c.bf16 %v1064, %v1063
        %1067 = vrot.lane.b32.xlu0 %v867, 112
        %v1068 = vpop.permute.xlu0 %1067
        %v1071 = vsel %vm877, %v1065, 0
        %1073 = vmatprep.subr.bf16.mxu0 0
        %1074 = vmatpush1.bf16.msra.mxu0 0
        %1075 = vmatprep.subr.bf16.mxu0 0
        %1076 = vmatpush1.bf16.msra.mxu0 0
        %1077 = vmatprep.subr.bf16.mxu0 0
        %1078 = vmatpush1.bf16.msra.mxu0 0
        %1079 = vmatprep.subr.bf16.mxu0 0
        %1080 = vmatpush1.bf16.msra.mxu0 0
        %1081 = vmatprep.subr.bf16.mxu0 0
        %1082 = vmatpush1.bf16.msra.mxu0 0
        %1083 = vmatprep.subr.bf16.mxu0 0
        %1084 = vmatpush1.bf16.msra.mxu0 0
        %1085 = vmatprep.subr.bf16.mxu0 0
        %1086 = vmatpush1.bf16.msra.mxu0 0
        %1087 = vmatprep.subr.bf16.mxu0 0
        %1088 = vmatpush1.bf16.msra.mxu0 %v1068
        %1089 = vmatprep.subr.bf16.mxu0 0
        %1090 = vmatpush2.bf16.msra.mxu0 0
        %1091 = vmatprep.subr.bf16.mxu0 0
        %1092 = vmatpush2.bf16.msra.mxu0 0
        %1093 = vmatprep.subr.bf16.mxu0 0
        %1094 = vmatpush2.bf16.msra.mxu0 0
        %1095 = vmatprep.subr.bf16.mxu0 0
        %1096 = vmatpush2.bf16.msra.mxu0 0
        %1097 = vmatprep.subr.bf16.mxu0 0
        %1098 = vmatpush2.bf16.msra.mxu0 0
        %1099 = vmatprep.subr.bf16.mxu0 0
        %1100 = vmatpush2.bf16.msra.mxu0 0
        %1101 = vmatprep.subr.bf16.mxu0 0
        %1102 = vmatpush2.bf16.msra.mxu0 0
        %1103 = vmatprep.subr.bf16.mxu0 0
        %1104 = vmatpush2.bf16.msra.mxu0 0
        %1105 = vmatprep.mubr.bf16.mxu0 0
        %1106 = vmatmul.mubr.bf16.gmra.mxu0 %v1071
        %v1107 = vpop.f32.mrf.mxu0
        %v1108 = vadd.f32 0.0, %v1107
        %v1109 = vpop.f32.mrf.mxu0
        %v1110 = vpop.f32.mrf.mxu0
        %v1111 = vadd.f32 0.0, %v1110
        %v1112 = vpop.f32.mrf.mxu0
        %1113 = vdwg.mxu0
        %1114 = vrot.lane.b32.xlu0 %v866, 96
        %v1115 = vpop.permute.xlu0 %1114
        %1116 = vrot.lane.b32.xlu0 %v866, 32
        %v1117 = vpop.permute.xlu0 %1116
        %v1119 = vsel %vm877, %v1115, 0
        %v1122 = vsel %vm877, %v1117, 0
        %1124 = vmatprep.subr.bf16.mxu0 0
        %1125 = vmatpush1.bf16.xpose.msra.mxu0 0
        %1126 = vmatprep.subr.bf16.mxu0 0
        %1127 = vmatpush1.bf16.xpose.msra.mxu0 0
        %1128 = vmatprep.subr.bf16.mxu0 0
        %1129 = vmatpush1.bf16.xpose.msra.mxu0 0
        %1130 = vmatprep.subr.bf16.mxu0 0
        %1131 = vmatpush1.bf16.xpose.msra.mxu0 0
        %1132 = vmatprep.subr.bf16.mxu0 0
        %1133 = vmatpush1.bf16.xpose.msra.mxu0 0
        %1134 = vmatprep.subr.bf16.mxu0 0
        %1135 = vmatpush1.bf16.xpose.msra.mxu0 0
        %1136 = vmatprep.subr.bf16.mxu0 0
        %1137 = vmatpush1.bf16.xpose.msra.mxu0 0
        %1138 = vmatprep.subr.bf16.mxu0 0
        %1139 = vmatpush1.bf16.xpose.msra.mxu0 %v1122
        %1140 = vmatprep.subr.bf16.mxu0 0
        %1141 = vmatpush2.bf16.xpose.msra.mxu0 0
        %1142 = vmatprep.subr.bf16.mxu0 0
        %1143 = vmatpush2.bf16.xpose.msra.mxu0 0
        %1144 = vmatprep.subr.bf16.mxu0 0
        %1145 = vmatpush2.bf16.xpose.msra.mxu0 0
        %1146 = vmatprep.subr.bf16.mxu0 0
        %1147 = vmatpush2.bf16.xpose.msra.mxu0 0
        %1148 = vmatprep.subr.bf16.mxu0 0
        %1149 = vmatpush2.bf16.xpose.msra.mxu0 0
        %1150 = vmatprep.subr.bf16.mxu0 0
        %1151 = vmatpush2.bf16.xpose.msra.mxu0 0
        %1152 = vmatprep.subr.bf16.mxu0 0
        %1153 = vmatpush2.bf16.xpose.msra.mxu0 0
        %1154 = vmatprep.subr.bf16.mxu0 0
        %1155 = vmatpush2.bf16.xpose.msra.mxu0 0
        %1156 = vmatprep.mubr.bf16.mxu0 0
        %1157 = vmatmul.mubr.bf16.gmra.mxu0 %v1119
        %v1158 = vpop.f32.mrf.mxu0
        %v1159 = vadd.f32 %v872, %v1158
        %v1160 = vpop.f32.mrf.mxu0
        %v1161 = vpop.f32.mrf.mxu0
        %v1162 = vadd.f32 %v872, %v1161
        %v1163 = vpop.f32.mrf.mxu0
        %1164 = vdwg.mxu0
        %v1165 = vsel %vm877, %v1159, -inf
        %1166 = vmax.xlane.f32.xlu0 %v1165
        %v1167 = vpop.xlane.xlu0 %1166
        %v1168 = vsel %vm877, %v1162, -inf
        %1169 = vmax.xlane.f32.xlu0 %v1168
        %v1170 = vpop.xlane.xlu0 %1169
        %v1171 = vsub.f32 %v1159, %v1167
        %v1172 = vsub.f32 %v1162, %v1170
        %v1173 = vmul.f32 %v1171, 1.442695
        %v1174 = vpow.pop %v1173
        %v1175 = vmul.f32 %v1172, 1.442695
        %v1176 = vpow.pop %v1175
        %v1177 = vsel %vm877, %v1174, 0.0
        %1178 = vadd.xlane.f32.xlu0 %v1177
        %v1179 = vpop.xlane.xlu0 %1178
        %v1180 = vsel %vm877, %v1176, 0.0
        %1181 = vadd.xlane.f32.xlu0 %v1180
        %v1182 = vpop.xlane.xlu0 %1181
        %v1183 = vrcp.pop %v1179
        %v1184 = vrcp.pop %v1182
        %v1185 = vmul.f32 %v1174, %v1183
        %v1186 = vmul.f32 %v1176, %v1184
        %v1187 = vpack.c.bf16 %v1186, %v1185
        %1188 = vrot.lane.b32.xlu0 %v867, 96
        %v1189 = vpop.permute.xlu0 %1188
        %v1192 = vsel %vm877, %v1187, 0
        %1194 = vmatprep.subr.bf16.mxu0 0
        %1195 = vmatpush1.bf16.msra.mxu0 0
        %1196 = vmatprep.subr.bf16.mxu0 0
        %1197 = vmatpush1.bf16.msra.mxu0 0
        %1198 = vmatprep.subr.bf16.mxu0 0
        %1199 = vmatpush1.bf16.msra.mxu0 0
        %1200 = vmatprep.subr.bf16.mxu0 0
        %1201 = vmatpush1.bf16.msra.mxu0 0
        %1202 = vmatprep.subr.bf16.mxu0 0
        %1203 = vmatpush1.bf16.msra.mxu0 0
        %1204 = vmatprep.subr.bf16.mxu0 0
        %1205 = vmatpush1.bf16.msra.mxu0 0
        %1206 = vmatprep.subr.bf16.mxu0 0
        %1207 = vmatpush1.bf16.msra.mxu0 0
        %1208 = vmatprep.subr.bf16.mxu0 0
        %1209 = vmatpush1.bf16.msra.mxu0 %v1189
        %1210 = vmatprep.subr.bf16.mxu0 0
        %1211 = vmatpush2.bf16.msra.mxu0 0
        %1212 = vmatprep.subr.bf16.mxu0 0
        %1213 = vmatpush2.bf16.msra.mxu0 0
        %1214 = vmatprep.subr.bf16.mxu0 0
        %1215 = vmatpush2.bf16.msra.mxu0 0
        %1216 = vmatprep.subr.bf16.mxu0 0
        %1217 = vmatpush2.bf16.msra.mxu0 0
        %1218 = vmatprep.subr.bf16.mxu0 0
        %1219 = vmatpush2.bf16.msra.mxu0 0
        %1220 = vmatprep.subr.bf16.mxu0 0
        %1221 = vmatpush2.bf16.msra.mxu0 0
        %1222 = vmatprep.subr.bf16.mxu0 0
        %1223 = vmatpush2.bf16.msra.mxu0 0
        %1224 = vmatprep.subr.bf16.mxu0 0
        %1225 = vmatpush2.bf16.msra.mxu0 0
        %1226 = vmatprep.mubr.bf16.mxu0 0
        %1227 = vmatmul.mubr.bf16.gmra.mxu0 %v1192
        %v1228 = vpop.f32.mrf.mxu0
        %v1229 = vadd.f32 0.0, %v1228
        %v1230 = vpop.f32.mrf.mxu0
        %v1231 = vpop.f32.mrf.mxu0
        %v1232 = vadd.f32 0.0, %v1231
        %v1233 = vpop.f32.mrf.mxu0
        %1234 = vdwg.mxu0
        %1235 = vrot.lane.b32.xlu0 %v866, 80
        %v1236 = vpop.permute.xlu0 %1235
        %1237 = vrot.lane.b32.xlu0 %v866, 16
        %v1238 = vpop.permute.xlu0 %1237
        %v1240 = vsel %vm877, %v1236, 0
        %v1243 = vsel %vm877, %v1238, 0
        %1245 = vmatprep.subr.bf16.mxu0 0
        %1246 = vmatpush1.bf16.xpose.msra.mxu0 0
        %1247 = vmatprep.subr.bf16.mxu0 0
        %1248 = vmatpush1.bf16.xpose.msra.mxu0 0
        %1249 = vmatprep.subr.bf16.mxu0 0
        %1250 = vmatpush1.bf16.xpose.msra.mxu0 0
        %1251 = vmatprep.subr.bf16.mxu0 0
        %1252 = vmatpush1.bf16.xpose.msra.mxu0 0
        %1253 = vmatprep.subr.bf16.mxu0 0
        %1254 = vmatpush1.bf16.xpose.msra.mxu0 0
        %1255 = vmatprep.subr.bf16.mxu0 0
        %1256 = vmatpush1.bf16.xpose.msra.mxu0 0
        %1257 = vmatprep.subr.bf16.mxu0 0
        %1258 = vmatpush1.bf16.xpose.msra.mxu0 0
        %1259 = vmatprep.subr.bf16.mxu0 0
        %1260 = vmatpush1.bf16.xpose.msra.mxu0 %v1243
        %1261 = vmatprep.subr.bf16.mxu0 0
        %1262 = vmatpush2.bf16.xpose.msra.mxu0 0
        %1263 = vmatprep.subr.bf16.mxu0 0
        %1264 = vmatpush2.bf16.xpose.msra.mxu0 0
        %1265 = vmatprep.subr.bf16.mxu0 0
        %1266 = vmatpush2.bf16.xpose.msra.mxu0 0
        %1267 = vmatprep.subr.bf16.mxu0 0
        %1268 = vmatpush2.bf16.xpose.msra.mxu0 0
        %1269 = vmatprep.subr.bf16.mxu0 0
        %1270 = vmatpush2.bf16.xpose.msra.mxu0 0
        %1271 = vmatprep.subr.bf16.mxu0 0
        %1272 = vmatpush2.bf16.xpose.msra.mxu0 0
        %1273 = vmatprep.subr.bf16.mxu0 0
        %1274 = vmatpush2.bf16.xpose.msra.mxu0 0
        %1275 = vmatprep.subr.bf16.mxu0 0
        %1276 = vmatpush2.bf16.xpose.msra.mxu0 0
        %1277 = vmatprep.mubr.bf16.mxu0 0
        %1278 = vmatmul.mubr.bf16.gmra.mxu0 %v1240
        %v1279 = vpop.f32.mrf.mxu0
        %v1280 = vadd.f32 %v872, %v1279
        %v1281 = vpop.f32.mrf.mxu0
        %v1282 = vpop.f32.mrf.mxu0
        %v1283 = vadd.f32 %v872, %v1282
        %v1284 = vpop.f32.mrf.mxu0
        %1285 = vdwg.mxu0
        %v1286 = vsel %vm877, %v1280, -inf
        %1287 = vmax.xlane.f32.xlu0 %v1286
        %v1288 = vpop.xlane.xlu0 %1287
        %v1289 = vsel %vm877, %v1283, -inf
        %1290 = vmax.xlane.f32.xlu0 %v1289
        %v1291 = vpop.xlane.xlu0 %1290
        %v1292 = vsub.f32 %v1280, %v1288
        %v1293 = vsub.f32 %v1283, %v1291
        %v1294 = vmul.f32 %v1292, 1.442695
        %v1295 = vpow.pop %v1294
        %v1296 = vmul.f32 %v1293, 1.442695
        %v1297 = vpow.pop %v1296
        %v1298 = vsel %vm877, %v1295, 0.0
        %1299 = vadd.xlane.f32.xlu0 %v1298
        %v1300 = vpop.xlane.xlu0 %1299
        %v1301 = vsel %vm877, %v1297, 0.0
        %1302 = vadd.xlane.f32.xlu0 %v1301
        %v1303 = vpop.xlane.xlu0 %1302
        %v1304 = vrcp.pop %v1300
        %v1305 = vrcp.pop %v1303
        %v1306 = vmul.f32 %v1295, %v1304
        %v1307 = vmul.f32 %v1297, %v1305
        %v1308 = vpack.c.bf16 %v1307, %v1306
        %1309 = vrot.lane.b32.xlu0 %v867, 80
        %v1310 = vpop.permute.xlu0 %1309
        %v1313 = vsel %vm877, %v1308, 0
        %1315 = vmatprep.subr.bf16.mxu0 0
        %1316 = vmatpush1.bf16.msra.mxu0 0
        %1317 = vmatprep.subr.bf16.mxu0 0
        %1318 = vmatpush1.bf16.msra.mxu0 0
        %1319 = vmatprep.subr.bf16.mxu0 0
        %1320 = vmatpush1.bf16.msra.mxu0 0
        %1321 = vmatprep.subr.bf16.mxu0 0
        %1322 = vmatpush1.bf16.msra.mxu0 0
        %1323 = vmatprep.subr.bf16.mxu0 0
        %1324 = vmatpush1.bf16.msra.mxu0 0
        %1325 = vmatprep.subr.bf16.mxu0 0
        %1326 = vmatpush1.bf16.msra.mxu0 0
        %1327 = vmatprep.subr.bf16.mxu0 0
        %1328 = vmatpush1.bf16.msra.mxu0 0
        %1329 = vmatprep.subr.bf16.mxu0 0
        %1330 = vmatpush1.bf16.msra.mxu0 %v1310
        %1331 = vmatprep.subr.bf16.mxu0 0
        %1332 = vmatpush2.bf16.msra.mxu0 0
        %1333 = vmatprep.subr.bf16.mxu0 0
        %1334 = vmatpush2.bf16.msra.mxu0 0
        %1335 = vmatprep.subr.bf16.mxu0 0
        %1336 = vmatpush2.bf16.msra.mxu0 0
        %1337 = vmatprep.subr.bf16.mxu0 0
        %1338 = vmatpush2.bf16.msra.mxu0 0
        %1339 = vmatprep.subr.bf16.mxu0 0
        %1340 = vmatpush2.bf16.msra.mxu0 0
        %1341 = vmatprep.subr.bf16.mxu0 0
        %1342 = vmatpush2.bf16.msra.mxu0 0
        %1343 = vmatprep.subr.bf16.mxu0 0
        %1344 = vmatpush2.bf16.msra.mxu0 0
        %1345 = vmatprep.subr.bf16.mxu0 0
        %1346 = vmatpush2.bf16.msra.mxu0 0
        %1347 = vmatprep.mubr.bf16.mxu0 0
        %1348 = vmatmul.mubr.bf16.gmra.mxu0 %v1313
        %v1349 = vpop.f32.mrf.mxu0
        %v1350 = vadd.f32 0.0, %v1349
        %v1351 = vpop.f32.mrf.mxu0
        %v1352 = vpop.f32.mrf.mxu0
        %v1353 = vadd.f32 0.0, %v1352
        %v1354 = vpop.f32.mrf.mxu0
        %1355 = vdwg.mxu0
        %1358 = vrot.lane.b32.xlu0 %v1108, 16
        %v1359 = vpop.permute.xlu0 %1358
        %1360 = vrot.lane.b32.xlu0 %v1111, 16
        %v1361 = vpop.permute.xlu0 %1360
        %1366 = vrot.lane.b32.xlu0 %v1229, 32
        %v1367 = vpop.permute.xlu0 %1366
        %1368 = vrot.lane.b32.xlu0 %v1232, 32
        %v1369 = vpop.permute.xlu0 %1368
        %1374 = vrot.lane.b32.xlu0 %v1350, 48
        %v1375 = vpop.permute.xlu0 %1374
        %1376 = vrot.lane.b32.xlu0 %v1353, 48
        %v1377 = vpop.permute.xlu0 %1376
        %v1380 = vsel %vm877, %v986, %v1359
        %v1381 = vsel %vm877, %v989, %v1361
        %vm1382 = vcmask 261120
        %v1383 = vsel %vm1382, %v1380, %v1367
        %v1384 = vsel %vm1382, %v1381, %v1369
        %vm1385 = vcmask 392192
        %v1386 = vsel %vm1385, %v1383, %v1375
        %v1387 = vsel %vm1385, %v1384, %v1377
        %v1388 = vpack.c.bf16 %v1387, %v1386
        %v1389 = vld [vmem:[%s718] sm:$0xf]
        %v1390 = vld [vmem:[%s718 + $0x4] sm:$0xf]
        %v1391 = vld [vmem:[%s718 + $0x8] sm:$0xf]
        %v1392 = vld [vmem:[%s718 + $0xc] sm:$0xf]
        %v1393 = vld [vmem:[%s718 + $0x10] sm:$0xf]
        %v1394 = vld [vmem:[%s718 + $0x14] sm:$0xf]
        %v1395 = vld [vmem:[%s718 + $0x18] sm:$0xf]
        %v1396 = vld [vmem:[%s718 + $0x1c] sm:$0xf]
        %v1397 = vld [vmem:[%s721] sm:$0x1]
        %v1399 = vlaneseq
        %v1400 = vshrl.u32 %v1399, 7
        %v1401 = vsub.s32 0, %v1400
        %v1402 = vrot.slane %v1397, %v1401
        %v1412 = vunpack.c.l.b16 %v1389
        %v1413 = vunpack.c.l.b16 %v1390
        %v1414 = vunpack.c.l.b16 %v1391
        %v1415 = vunpack.c.l.b16 %v1392
        %v1416 = vunpack.c.l.b16 %v1393
        %v1417 = vunpack.c.l.b16 %v1394
        %v1418 = vunpack.c.l.b16 %v1395
        %v1419 = vunpack.c.l.b16 %v1396
        %v1420 = vpack.c.b16 %v1413, %v1412
        %v1421 = vpack.c.b16 %v1415, %v1414
        %v1422 = vpack.c.b16 %v1417, %v1416
        %v1423 = vpack.c.b16 %v1419, %v1418
        %v1429 = vsel %vm819, %v1388, 0
        %1431 = vmatprep.subr.bf16.mxu0 0
        %1432 = vmatpush1.bf16.msra.mxu0 0
        %1433 = vmatprep.subr.bf16.mxu0 0
        %1434 = vmatpush1.bf16.msra.mxu0 0
        %1435 = vmatprep.subr.bf16.mxu0 0
        %1436 = vmatpush1.bf16.msra.mxu0 0
        %1437 = vmatprep.subr.bf16.mxu0 0
        %1438 = vmatpush1.bf16.msra.mxu0 0
        %1439 = vmatprep.subr.bf16.mxu0 0
        %1440 = vmatpush1.bf16.msra.mxu0 %v1423
        %1441 = vmatprep.subr.bf16.mxu0 0
        %1442 = vmatpush1.bf16.msra.mxu0 %v1422
        %1443 = vmatprep.subr.bf16.mxu0 0
        %1444 = vmatpush1.bf16.msra.mxu0 %v1421
        %1445 = vmatprep.subr.bf16.mxu0 0
        %1446 = vmatpush1.bf16.msra.mxu0 %v1420
        %1447 = vmatprep.subr.bf16.mxu0 0
        %1448 = vmatpush2.bf16.msra.mxu0 0
        %1449 = vmatprep.subr.bf16.mxu0 0
        %1450 = vmatpush2.bf16.msra.mxu0 0
        %1451 = vmatprep.subr.bf16.mxu0 0
        %1452 = vmatpush2.bf16.msra.mxu0 0
        %1453 = vmatprep.subr.bf16.mxu0 0
        %1454 = vmatpush2.bf16.msra.mxu0 0
        %1455 = vmatprep.subr.bf16.mxu0 0
        %1456 = vmatpush2.bf16.msra.mxu0 0
        %1457 = vmatprep.subr.bf16.mxu0 0
        %1458 = vmatpush2.bf16.msra.mxu0 0
        %1459 = vmatprep.subr.bf16.mxu0 0
        %1460 = vmatpush2.bf16.msra.mxu0 0
        %1461 = vmatprep.subr.bf16.mxu0 0
        %1462 = vmatpush2.bf16.msra.mxu0 0
        %1463 = vmatprep.mubr.bf16.mxu0 0
        %1464 = vmatmul.mubr.bf16.gmra.mxu0 %v1429
        %v1465 = vpop.f32.mrf.mxu0
        %v1466 = vadd.f32 %v1402, %v1465
        %v1467 = vpop.f32.mrf.mxu0
        %v1468 = vpop.f32.mrf.mxu0
        %v1469 = vadd.f32 %v1402, %v1468
        %v1470 = vpop.f32.mrf.mxu0
        %1471 = vdwg.mxu0
        %v1472 = vadd.f32 %v1466, %v755
        %v1473 = vadd.f32 %v1469, %v756
        %v1474 = vld [vmem:[%s724] sm:$0x1]
        %v1475 = vld [vmem:[%s727] sm:$0x1]
        %v1476 = vsel %vm819, %v1472, 0.0
        %1477 = vadd.xlane.f32.xlu0 %v1476
        %v1478 = vpop.xlane.xlu0 %1477
        %v1479 = vsel %vm819, %v1473, 0.0
        %1480 = vadd.xlane.f32.xlu0 %v1479
        %v1481 = vpop.xlane.xlu0 %1480
        %v1482 = vrcp.pop 64.0
        %v1483 = vmul.f32 %v1478, %v1482
        %v1484 = vmul.f32 %v1481, %v1482
        %v1485 = vsub.f32 %v1472, %v1483
        %v1486 = vsub.f32 %v1473, %v1484
        %v1487 = vmul.f32 %v1485, %v1485
        %v1488 = vmul.f32 %v1486, %v1486
        %v1489 = vsel %vm819, %v1487, 0.0
        %1490 = vadd.xlane.f32.xlu0 %v1489
        %v1491 = vpop.xlane.xlu0 %1490
        %v1492 = vsel %vm819, %v1488, 0.0
        %1493 = vadd.xlane.f32.xlu0 %v1492
        %v1494 = vpop.xlane.xlu0 %1493
        %v1495 = vmul.f32 %v1491, %v1482
        %v1496 = vmul.f32 %v1494, %v1482
        %v1497 = vadd.f32 %v1495, 1e-12
        %v1498 = vadd.f32 %v1496, 1e-12
        %v1499 = vrsqrt.pop %v1497
        %v1500 = vrsqrt.pop %v1498
        %v1501 = vmul.f32 %v1485, %v1499
        %v1502 = vmul.f32 %v1486, %v1500
        %v1504 = vlaneseq
        %v1505 = vshrl.u32 %v1504, 7
        %v1506 = vsub.s32 0, %v1505
        %v1507 = vrot.slane %v1474, %v1506
        %v1509 = vmul.f32 %v1501, %v1507
        %v1510 = vmul.f32 %v1502, %v1507
        %v1512 = vlaneseq
        %v1513 = vshrl.u32 %v1512, 7
        %v1514 = vsub.s32 0, %v1513
        %v1515 = vrot.slane %v1475, %v1514
        %v1517 = vadd.f32 %v1509, %v1515
        %v1518 = vadd.f32 %v1510, %v1515
        %v1519 = vpack.c.bf16 %v1518, %v1517
        %v1520 = vld [vmem:[%s612] sm:$0xf]
        %v1521 = vld [vmem:[%s612 + $0x4] sm:$0xf]
        %v1522 = vld [vmem:[%s612 + $0x8] sm:$0xf]
        %v1523 = vld [vmem:[%s612 + $0xc] sm:$0xf]
        %v1524 = vld [vmem:[%s612 + $0x10] sm:$0xf]
        %v1525 = vld [vmem:[%s612 + $0x14] sm:$0xf]
        %v1526 = vld [vmem:[%s612 + $0x18] sm:$0xf]
        %v1527 = vld [vmem:[%s612 + $0x1c] sm:$0xf]
        %v1528 = vld [vmem:[%s730] sm:$0x1]
        %v1530 = vlaneseq
        %v1531 = vshrl.u32 %v1530, 7
        %v1532 = vsub.s32 0, %v1531
        %v1533 = vrot.slane %v1528, %v1532
        %v1543 = vunpack.c.l.b16 %v1520
        %v1544 = vunpack.c.l.b16 %v1521
        %v1545 = vunpack.c.l.b16 %v1522
        %v1546 = vunpack.c.l.b16 %v1523
        %v1547 = vunpack.c.l.b16 %v1524
        %v1548 = vunpack.c.l.b16 %v1525
        %v1549 = vunpack.c.l.b16 %v1526
        %v1550 = vunpack.c.l.b16 %v1527
        %v1551 = vpack.c.b16 %v1544, %v1543
        %v1552 = vpack.c.b16 %v1546, %v1545
        %v1553 = vpack.c.b16 %v1548, %v1547
        %v1554 = vpack.c.b16 %v1550, %v1549
        %v1560 = vsel %vm819, %v1519, 0
        %1562 = vmatprep.subr.bf16.mxu0 0
        %1563 = vmatpush1.bf16.msra.mxu0 0
        %1564 = vmatprep.subr.bf16.mxu0 0
        %1565 = vmatpush1.bf16.msra.mxu0 0
        %1566 = vmatprep.subr.bf16.mxu0 0
        %1567 = vmatpush1.bf16.msra.mxu0 0
        %1568 = vmatprep.subr.bf16.mxu0 0
        %1569 = vmatpush1.bf16.msra.mxu0 0
        %1570 = vmatprep.subr.bf16.mxu0 0
        %1571 = vmatpush1.bf16.msra.mxu0 %v1554
        %1572 = vmatprep.subr.bf16.mxu0 0
        %1573 = vmatpush1.bf16.msra.mxu0 %v1553
        %1574 = vmatprep.subr.bf16.mxu0 0
        %1575 = vmatpush1.bf16.msra.mxu0 %v1552
        %1576 = vmatprep.subr.bf16.mxu0 0
        %1577 = vmatpush1.bf16.msra.mxu0 %v1551
        %1578 = vmatprep.subr.bf16.mxu0 0
        %1579 = vmatpush2.bf16.msra.mxu0 0
        %1580 = vmatprep.subr.bf16.mxu0 0
        %1581 = vmatpush2.bf16.msra.mxu0 0
        %1582 = vmatprep.subr.bf16.mxu0 0
        %1583 = vmatpush2.bf16.msra.mxu0 0
        %1584 = vmatprep.subr.bf16.mxu0 0
        %1585 = vmatpush2.bf16.msra.mxu0 0
        %1586 = vmatprep.subr.bf16.mxu0 0
        %1587 = vmatpush2.bf16.msra.mxu0 0
        %1588 = vmatprep.subr.bf16.mxu0 0
        %1589 = vmatpush2.bf16.msra.mxu0 0
        %1590 = vmatprep.subr.bf16.mxu0 0
        %1591 = vmatpush2.bf16.msra.mxu0 0
        %1592 = vmatprep.subr.bf16.mxu0 0
        %1593 = vmatpush2.bf16.msra.mxu0 0
        %1594 = vmatprep.mubr.bf16.mxu0 0
        %1595 = vmatmul.mubr.bf16.gmra.mxu0 %v1560
        %v1596 = vpop.f32.mrf.mxu0
        %v1597 = vadd.f32 %v1533, %v1596
        %v1598 = vpop.f32.mrf.mxu0
        %v1599 = vpop.f32.mrf.mxu0
        %v1600 = vadd.f32 %v1533, %v1599
        %v1601 = vpop.f32.mrf.mxu0
        %1602 = vdwg.mxu0
        %v1603 = vmul.f32 %v1597, 0.5
        %v1604 = vmul.f32 %v1600, 0.5
        %v1605 = vmul.f32 %v1597, 0.044715
        %v1606 = vmul.f32 %v1600, 0.044715
        %v1607 = vmul.f32 %v1605, %v1597
        %v1608 = vmul.f32 %v1606, %v1600
        %v1609 = vmul.f32 %v1607, %v1597
        %v1610 = vmul.f32 %v1608, %v1600
        %v1611 = vadd.f32 %v1597, %v1609
        %v1612 = vadd.f32 %v1600, %v1610
        %v1613 = vmul.f32 %v1611, 0.7978846
        %v1614 = vmul.f32 %v1612, 0.7978846
        %v1615 = vtanh.pop %v1613
        %v1616 = vtanh.pop %v1614
        %v1617 = vadd.f32 %v1615, 1.0
        %v1618 = vadd.f32 %v1616, 1.0
        %v1619 = vmul.f32 %v1603, %v1617
        %v1620 = vmul.f32 %v1604, %v1618
        %v1621 = vpack.c.bf16 %v1620, %v1619
        %v1622 = vld [vmem:[%s735] sm:$0xf]
        %v1623 = vld [vmem:[%s735 + $0x4] sm:$0xf]
        %v1624 = vld [vmem:[%s735 + $0x8] sm:$0xf]
        %v1625 = vld [vmem:[%s735 + $0xc] sm:$0xf]
        %v1626 = vld [vmem:[%s735 + $0x10] sm:$0xf]
        %v1627 = vld [vmem:[%s735 + $0x14] sm:$0xf]
        %v1628 = vld [vmem:[%s735 + $0x18] sm:$0xf]
        %v1629 = vld [vmem:[%s735 + $0x1c] sm:$0xf]
        %v1630 = vld [vmem:[%s735 + $0x20] sm:$0xf]
        %v1631 = vld [vmem:[%s735 + $0x24] sm:$0xf]
        %v1632 = vld [vmem:[%s735 + $0x28] sm:$0xf]
        %v1633 = vld [vmem:[%s735 + $0x2c] sm:$0xf]
        %v1634 = vld [vmem:[%s735 + $0x30] sm:$0xf]
        %v1635 = vld [vmem:[%s735 + $0x34] sm:$0xf]
        %v1636 = vld [vmem:[%s735 + $0x38] sm:$0xf]
        %v1637 = vld [vmem:[%s735 + $0x3c] sm:$0xf]
        %v1638 = vld [vmem:[%s738] sm:$0x1]
        %v1640 = vlaneseq
        %v1641 = vshrl.u32 %v1640, 7
        %v1642 = vsub.s32 0, %v1641
        %v1643 = vrot.slane %v1638, %v1642
        %v1661 = vunpack.c.l.b16 %v1622
        %v1662 = vunpack.c.l.b16 %v1623
        %v1663 = vunpack.c.l.b16 %v1624
        %v1664 = vunpack.c.l.b16 %v1625
        %v1665 = vunpack.c.l.b16 %v1626
        %v1666 = vunpack.c.l.b16 %v1627
        %v1667 = vunpack.c.l.b16 %v1628
        %v1668 = vunpack.c.l.b16 %v1629
        %v1669 = vunpack.c.l.b16 %v1630
        %v1670 = vunpack.c.l.b16 %v1631
        %v1671 = vunpack.c.l.b16 %v1632
        %v1672 = vunpack.c.l.b16 %v1633
        %v1673 = vunpack.c.l.b16 %v1634
        %v1674 = vunpack.c.l.b16 %v1635
        %v1675 = vunpack.c.l.b16 %v1636
        %v1676 = vunpack.c.l.b16 %v1637
        %v1677 = vpack.c.b16 %v1662, %v1661
        %v1678 = vpack.c.b16 %v1664, %v1663
        %v1679 = vpack.c.b16 %v1666, %v1665
        %v1680 = vpack.c.b16 %v1668, %v1667
        %v1681 = vpack.c.b16 %v1670, %v1669
        %v1682 = vpack.c.b16 %v1672, %v1671
        %v1683 = vpack.c.b16 %v1674, %v1673
        %v1684 = vpack.c.b16 %v1676, %v1675
        %1693 = vmatprep.subr.bf16.mxu0 0
        %1694 = vmatpush1.bf16.msra.mxu0 %v1684
        %1695 = vmatprep.subr.bf16.mxu0 0
        %1696 = vmatpush1.bf16.msra.mxu0 %v1683
        %1697 = vmatprep.subr.bf16.mxu0 0
        %1698 = vmatpush1.bf16.msra.mxu0 %v1682
        %1699 = vmatprep.subr.bf16.mxu0 0
        %1700 = vmatpush1.bf16.msra.mxu0 %v1681
        %1701 = vmatprep.subr.bf16.mxu0 0
        %1702 = vmatpush1.bf16.msra.mxu0 %v1680
        %1703 = vmatprep.subr.bf16.mxu0 0
        %1704 = vmatpush1.bf16.msra.mxu0 %v1679
        %1705 = vmatprep.subr.bf16.mxu0 0
        %1706 = vmatpush1.bf16.msra.mxu0 %v1678
        %1707 = vmatprep.subr.bf16.mxu0 0
        %1708 = vmatpush1.bf16.msra.mxu0 %v1677
        %1709 = vmatprep.subr.bf16.mxu0 0
        %1710 = vmatpush2.bf16.msra.mxu0 0
        %1711 = vmatprep.subr.bf16.mxu0 0
        %1712 = vmatpush2.bf16.msra.mxu0 0
        %1713 = vmatprep.subr.bf16.mxu0 0
        %1714 = vmatpush2.bf16.msra.mxu0 0
        %1715 = vmatprep.subr.bf16.mxu0 0
        %1716 = vmatpush2.bf16.msra.mxu0 0
        %1717 = vmatprep.subr.bf16.mxu0 0
        %1718 = vmatpush2.bf16.msra.mxu0 0
        %1719 = vmatprep.subr.bf16.mxu0 0
        %1720 = vmatpush2.bf16.msra.mxu0 0
        %1721 = vmatprep.subr.bf16.mxu0 0
        %1722 = vmatpush2.bf16.msra.mxu0 0
        %1723 = vmatprep.subr.bf16.mxu0 0
        %1724 = vmatpush2.bf16.msra.mxu0 0
        %1725 = vmatprep.mubr.bf16.mxu0 0
        %1726 = vmatmul.mubr.bf16.gmra.mxu0 %v1621
        %v1727 = vpop.f32.mrf.mxu0
        %v1728 = vadd.f32 %v1643, %v1727
        %v1729 = vpop.f32.mrf.mxu0
        %v1730 = vpop.f32.mrf.mxu0
        %v1731 = vadd.f32 %v1643, %v1730
        %v1732 = vpop.f32.mrf.mxu0
        %1733 = vdwg.mxu0
        %v1734 = vadd.f32 %v1728, %v1517
        %v1735 = vadd.f32 %v1731, %v1518
        %v1736 = vld [vmem:[%s741] sm:$0x1]
        %v1737 = vld [vmem:[%s744] sm:$0x1]
        %v1738 = vsel %vm819, %v1734, 0.0
        %1739 = vadd.xlane.f32.xlu0 %v1738
        %v1740 = vpop.xlane.xlu0 %1739
        %v1741 = vsel %vm819, %v1735, 0.0
        %1742 = vadd.xlane.f32.xlu0 %v1741
        %v1743 = vpop.xlane.xlu0 %1742
        %v1744 = vmul.f32 %v1740, %v1482
        %v1745 = vmul.f32 %v1743, %v1482
        %v1746 = vsub.f32 %v1734, %v1744
        %v1747 = vsub.f32 %v1735, %v1745
        %v1748 = vmul.f32 %v1746, %v1746
        %v1749 = vmul.f32 %v1747, %v1747
        %v1750 = vsel %vm819, %v1748, 0.0
        %1751 = vadd.xlane.f32.xlu0 %v1750
        %v1752 = vpop.xlane.xlu0 %1751
        %v1753 = vsel %vm819, %v1749, 0.0
        %1754 = vadd.xlane.f32.xlu0 %v1753
        %v1755 = vpop.xlane.xlu0 %1754
        %v1756 = vmul.f32 %v1752, %v1482
        %v1757 = vmul.f32 %v1755, %v1482
        %v1758 = vadd.f32 %v1756, 1e-12
        %v1759 = vadd.f32 %v1757, 1e-12
        %v1760 = vrsqrt.pop %v1758
        %v1761 = vrsqrt.pop %v1759
        %v1762 = vmul.f32 %v1746, %v1760
        %v1763 = vmul.f32 %v1747, %v1761
        %v1765 = vlaneseq
        %v1766 = vshrl.u32 %v1765, 7
        %v1767 = vsub.s32 0, %v1766
        %v1768 = vrot.slane %v1736, %v1767
        %v1770 = vmul.f32 %v1762, %v1768
        %v1771 = vmul.f32 %v1763, %v1768
        %v1773 = vlaneseq
        %v1774 = vshrl.u32 %v1773, 7
        %v1775 = vsub.s32 0, %v1774
        %v1776 = vrot.slane %v1737, %v1775
        %v1778 = vadd.f32 %v1770, %v1776
        %v1779 = vadd.f32 %v1771, %v1776
        %1780 = vst.msk [vmem:[%s705] sm:$0xff] %vm819, %v1778
        %1781 = vst.msk [vmem:[%s705 + $0x8] sm:$0xff] %vm819, %v1779
        %s1782 = sand.u32 %s418, 1
        %s1783 = scalar_lea.sflag [#allocation4], %s1782
        %s1784 = sand.u32 %s418, 1
        %s1785 = smul.addr %s1784, 16
        %s1786 = scalar_lea.vmem [#allocation8], %s1785
        // Predicated region
        $region93: #{tpu_custom_call.1} parent=75 // pred_check
          %p1787 = pneg %p428
        $region94: #{tpu_custom_call.1} parent=75 // pred_check_branch
          %1789 = sbr.rel (%p1787) target = $region96
        $region95: #{tpu_custom_call.1} parent=75 // pred_region
          %s1791 = ssub.s32 256, 256
          %1792 = vsyncadd %s1783, %s1791
          %s1793 = smul.addr %s38, 2
          %s1794 = smul.addr %s1793, 128
          %s1795 = scalar_lea.hbm %s14, %s1794
          %s1796 = sshll.u32 %s1786, 4
          %s1797 = int_to_ptr.vmem [resolvable:$true] %s1796
          %1802 = dma.vmem_to_hbm [thread:$0]  %s1797, 256, %s1795, %s1783, 128, 128, 8
        $region96: #{tpu_custom_call.1} parent=75 // pred_fallthru
          _
      $region76: #{tpu_custom_call.1} parent=5 // pred_fallthru
        _
      %p1803 = scmp.le.s32.totalorder 2, %s29
      // Predicated region
      $region97: #{tpu_custom_call.1} parent=5 // pred_check
        %p1804 = pneg %p1803
      $region98: #{tpu_custom_call.1} parent=5 // pred_check_branch
        %1806 = sbr.rel (%p1804) target = $region100
      $region99: #{tpu_custom_call.1} parent=5 // pred_region
        %s1807 = ssub.s32 %s29, 2
        // Predicated region
        $region101: #{tpu_custom_call.1} parent=99 // pred_check
          %p1808 = pneg %p434
        $region102: #{tpu_custom_call.1} parent=99 // pred_check_branch
          %1810 = sbr.rel (%p1808) target = $region104
        $region103: #{tpu_custom_call.1} parent=99 // pred_region
          %s1811 = sand.u32 %s419, 1
          %s1812 = scalar_lea.sflag [#allocation4], %s1811
          %s1813 = sand.u32 %s419, 1
          %s1814 = smul.addr %s1813, 16
          %s1815 = scalar_lea.vmem [#allocation8], %s1814
          %1816 = dma.done %s1812, 256
        $region104: #{tpu_custom_call.1} parent=99 // pred_fallthru
          _
      $region100: #{tpu_custom_call.1} parent=5 // pred_fallthru
        _
    $region6: #{tpu_custom_call.1} parent=1 // loop_footer
      %s33 = sadd.s32 1, %s29
    $region7: #{tpu_custom_call.1} parent=1 // loop_footer_branch
      %28 = sbr.rel target = $region3
    $region8: #{tpu_custom_call.1} parent=1 // loop_exit
      _
    %1817 = vsyncpa [#allocation3], 1
    %s1818 = scalar_lea.sflag [#allocation3], 1
    %1819 = vsyncpa %s1818, 1
    %1820 = vsyncpa [#allocation6], 1
    %s1821 = scalar_lea.sflag [#allocation6], 1
    %1822 = vsyncpa %s1821, 1
    %1823 = vsyncpa [#allocation4], 1
    %s1824 = scalar_lea.sflag [#allocation4], 1
    %1825 = vsyncpa %s1824, 1

</llo_original>
